<compile_context>
chip_gen: v6e
topology: v6e:2x2x1
jax: 0.10.0
libtpu: 0.0.40
codegen_flags: <defaults>
</compile_context>

<pallas_src>
import functools

import jax
import jax.numpy as jnp
from jax.experimental import pallas as pl
from jax.experimental.pallas import tpu as pltpu


def _round_up(n, m):
    return (n + m - 1) // m * m


def _pad_axis(x, target, axis):
    pad = target - x.shape[axis]
    if pad == 0:
        return x
    widths = [(0, 0)] * x.ndim
    widths[axis] = (0, pad)
    return jnp.pad(x, widths)


def _srl(x, n):
    """Logical right shift with shape-matched shift amount (lax-safe)."""
    return jax.lax.shift_right_logical(x, jnp.full(x.shape, n, x.dtype))


def _hash_uniform(shape, salt):
    """Counter-based uniform [0,1) generator using int32 ops only.

    Works on both the Mosaic TPU backend and in interpret mode (no TPU-only
    PRNG primitives).  murmur3 fmix32 finalizer over (row, col, salt).
    """
    row = jax.lax.broadcasted_iota(jnp.int32, shape, 0)
    col = jax.lax.broadcasted_iota(jnp.int32, shape, 1)
    x = row * jnp.int32(-1640531527)          # 0x9E3779B9 (golden ratio)
    x = x + col * jnp.int32(-862048943)       # 0xCC9E2D51
    x = x + salt
    x = x ^ _srl(x, 16)
    x = x * jnp.int32(-2048144789)            # 0x85EBCA6B
    x = x ^ _srl(x, 13)
    x = x * jnp.int32(-1028477387)            # 0xC2B2AE35
    x = x ^ _srl(x, 16)
    # Low 24 bits -> uniform [0, 1).
    return (x & jnp.int32(0xFFFFFF)).astype(jnp.float32) * (1.0 / float(1 << 24))


def mlp3_ln_dropout_kernel(seed_ref,
                           x_ref, w1_ref, b1_ref, g1_ref, be1_ref,
                           w2_ref, b2_ref, g2_ref, be2_ref,
                           w3_ref, b3_ref,
                           o_ref,
                           *, l_real, p_drop, training, eps):
    f32 = jnp.float32

    def layernorm(h, gamma, beta):
        # h: (block_b, l_pad) f32.  Padded columns (>= l_real) are exactly zero
        # (zero-padded weight columns + biases), so full-width sums equal the
        # real-column sums; divide by the real width.
        mean = jnp.sum(h, axis=-1, keepdims=True) * (1.0 / l_real)
        if l_real == h.shape[-1]:
            centered = h - mean
        else:
            lane = jax.lax.broadcasted_iota(jnp.int32, h.shape, dimension=1)
            centered = jnp.where(lane < l_real, h - mean, 0.0)
        var = jnp.sum(centered * centered, axis=-1, keepdims=True) * (1.0 / l_real)
        normed = centered * jax.lax.rsqrt(var + eps)
        # gamma/beta are zero-padded -> padded lanes stay exactly zero.
        return normed * gamma + beta

    def dropout(h, layer_idx):
        if (not training) or p_drop <= 0.0:
            return h
        keep_prob = 1.0 - p_drop
        # Mix seed, batch-tile index and layer index so every tile / layer gets
        # an independent mask.
        salt = (seed_ref[0] * jnp.int32(1000003)
                + pl.program_id(0) * jnp.int32(7919)
                + jnp.int32(layer_idx * 92821))
        u = _hash_uniform(h.shape, salt)
        keep = u < keep_prob
        return jnp.where(keep, h * (1.0 / keep_prob), 0.0)

    x = x_ref[...]

    # Layer 1: Linear -> LayerNorm -> ReLU -> Dropout
    h = jnp.dot(x, w1_ref[...], preferred_element_type=f32) + b1_ref[...]
    h = layernorm(h, g1_ref[...], be1_ref[...])
    h = jnp.maximum(h, 0.0)
    h = dropout(h, 1)

    # Layer 2: Linear -> LayerNorm -> ReLU -> Dropout
    h = jnp.dot(h.astype(w2_ref.dtype), w2_ref[...],
                preferred_element_type=f32) + b2_ref[...]
    h = layernorm(h, g2_ref[...], be2_ref[...])
    h = jnp.maximum(h, 0.0)
    h = dropout(h, 2)

    # Layer 3: Linear (no activation)
    out = jnp.dot(h.astype(w3_ref.dtype), w3_ref[...],
                  preferred_element_type=f32) + b3_ref[...]
    o_ref[...] = out.astype(o_ref.dtype)


@functools.partial(
    jax.jit,
    static_argnames=("block_b", "training", "p_drop", "compute_dtype"))
def mlp3_dropout_layernorm(x, params, seed, *, block_b=128, training=False,
                           p_drop=0.1, compute_dtype=jnp.float32):
    w1, b1, g1, be1, w2, b2, g2, be2, w3, b3 = params
    B, dim_in = x.shape
    l = w1.shape[1]
    dim_out = w3.shape[1]
    assert block_b % 8 == 0, "block_b must be a multiple of 8"

    # Lane-dense padding: features to multiples of 128, batch to block_b.
    dim_in_p = _round_up(dim_in, 128)
    l_p = _round_up(l, 128)
    dim_out_p = _round_up(dim_out, 128)
    B_p = _round_up(B, block_b)

    x_p = _pad_axis(_pad_axis(x, B_p, 0), dim_in_p, 1).astype(compute_dtype)
    w1_p = _pad_axis(_pad_axis(w1, dim_in_p, 0), l_p, 1).astype(compute_dtype)
    w2_p = _pad_axis(_pad_axis(w2, l_p, 0), l_p, 1).astype(compute_dtype)
    w3_p = _pad_axis(_pad_axis(w3, l_p, 0), dim_out_p, 1).astype(compute_dtype)
    b1_p = _pad_axis(b1.astype(jnp.float32), l_p, 0).reshape(1, l_p)
    g1_p = _pad_axis(g1.astype(jnp.float32), l_p, 0).reshape(1, l_p)
    be1_p = _pad_axis(be1.astype(jnp.float32), l_p, 0).reshape(1, l_p)
    b2_p = _pad_axis(b2.astype(jnp.float32), l_p, 0).reshape(1, l_p)
    g2_p = _pad_axis(g2.astype(jnp.float32), l_p, 0).reshape(1, l_p)
    be2_p = _pad_axis(be2.astype(jnp.float32), l_p, 0).reshape(1, l_p)
    b3_p = _pad_axis(b3.astype(jnp.float32), dim_out_p, 0).reshape(1, dim_out_p)

    seed_arr = jnp.asarray(seed, dtype=jnp.int32).reshape((1,))

    grid = (B_p // block_b,)

    kernel = functools.partial(
        mlp3_ln_dropout_kernel,
        l_real=l, p_drop=float(p_drop), training=bool(training), eps=1e-5)

    const = lambda i, seed: (0, 0)  # grid-invariant weights / biases
    in_specs = [
        pl.BlockSpec((block_b, dim_in_p), lambda i, seed: (i, 0)),  # x tile
        pl.BlockSpec((dim_in_p, l_p), const),                       # w1
        pl.BlockSpec((1, l_p), const),                              # b1
        pl.BlockSpec((1, l_p), const),                              # gamma1
        pl.BlockSpec((1, l_p), const),                              # beta1
        pl.BlockSpec((l_p, l_p), const),                            # w2
        pl.BlockSpec((1, l_p), const),                              # b2
        pl.BlockSpec((1, l_p), const),                              # gamma2
        pl.BlockSpec((1, l_p), const),                              # beta2
        pl.BlockSpec((l_p, dim_out_p), const),                      # w3
        pl.BlockSpec((1, dim_out_p), const),                        # b3
    ]
    out_specs = pl.BlockSpec((block_b, dim_out_p), lambda i, seed: (i, 0))

    out = pl.pallas_call(
        kernel,
        out_shape=jax.ShapeDtypeStruct((B_p, dim_out_p), jnp.float32),
        grid_spec=pltpu.PrefetchScalarGridSpec(
            num_scalar_prefetch=1,
            grid=grid,
            in_specs=in_specs,
            out_specs=out_specs,
        ),
        compiler_params=pltpu.CompilerParams(
            dimension_semantics=("parallel",),
        ),
    )(seed_arr, x_p, w1_p, b1_p, g1_p, be1_p,
      w2_p, b2_p, g2_p, be2_p, w3_p, b3_p)

    return out[:B, :dim_out]


def init_params(key, dim_in, l, dim_out, dtype=jnp.float32):
    """PyTorch-style nn.Linear init (uniform +/- 1/sqrt(fan_in)); W stored as
    (fan_in, fan_out).  LayerNorm: gamma=1, beta=0."""
    ks = jax.random.split(key, 6)

    def linear(kw, kb, fan_in, fan_out):
        bound = 1.0 / (fan_in ** 0.5)
        w = jax.random.uniform(kw, (fan_in, fan_out), dtype, minval=-bound, maxval=bound)
        b = jax.random.uniform(kb, (fan_out,), dtype, minval=-bound, maxval=bound)
        return w, b

    w1, b1 = linear(ks[0], ks[1], dim_in, l)
    w2, b2 = linear(ks[2], ks[3], l, l)
    w3, b3 = linear(ks[4], ks[5], l, dim_out)
    g1, be1 = jnp.ones((l,), dtype), jnp.zeros((l,), dtype)
    g2, be2 = jnp.ones((l,), dtype), jnp.zeros((l,), dtype)
    return (w1, b1, g1, be1, w2, b2, g2, be2, w3, b3)


def reference_forward(x, params, eps=1e-5):
    """Pure-JAX eval-mode reference (dropout = identity)."""
    w1, b1, g1, be1, w2, b2, g2, be2, w3, b3 = params

    def ln(h, g, b):
        mu = jnp.mean(h, axis=-1, keepdims=True)
        var = jnp.mean((h - mu) ** 2, axis=-1, keepdims=True)
        return (h - mu) / jnp.sqrt(var + eps) * g + b

    h = jnp.maximum(ln(x @ w1 + b1, g1, be1), 0.0)
    h = jnp.maximum(ln(h @ w2 + b2, g2, be2), 0.0)
    return h @ w3 + b3


if __name__ == "__main__":
    # Small dims consistent with MLP3_dropout_layerNorm(dim_in, l, dim_out);
    # batch sized so the grid has 2 parallel steps of 128 rows each.
    B, dim_in, l, dim_out = 256, 32, 64, 16

    key = jax.random.PRNGKey(0)
    kx, kp = jax.random.split(key)
    x = jax.random.normal(kx, (B, dim_in), dtype=jnp.float32)
    params = init_params(kp, dim_in, l, dim_out)

    # Eval mode (dropout is identity): must match the pure-JAX reference.
    out_eval = jax.block_until_ready(
        mlp3_dropout_layernorm(x, params, 0, block_b=128, training=False))
    expected = reference_forward(x, params)
    assert out_eval.shape == (B, dim_out)
    assert jnp.allclose(out_eval, expected, atol=1e-3, rtol=1e-3)

    # Training mode exercises the in-kernel dropout (counter-based hash PRNG).
    out_train = jax.block_until_ready(
        mlp3_dropout_layernorm(x, params, 1234, block_b=128, training=True))
    assert out_train.shape == (B, dim_out)
    assert bool(jnp.all(jnp.isfinite(out_train)))

    # bf16 fast path for v6e/v7x MXU (f32 accumulation inside the kernel).
    out_bf16 = jax.block_until_ready(
        mlp3_dropout_layernorm(x, params, 0, block_b=128, training=False,
                               compute_dtype=jnp.bfloat16))
    assert jnp.allclose(out_bf16, expected, atol=2.5e-1, rtol=5e-2)

    print("KERNEL_OK")
</pallas_src>

<mosaic_0001>
module attributes {stable_mosaic.version = 11 : i64} {
  func.func @mlp3_ln_dropout_kernel(%arg0: i32, %arg1: memref<1xi32, #tpu.memory_space<smem>>, %arg2: memref<128x128xf32, #tpu.memory_space<vmem>>, %arg3: memref<128x128xf32, #tpu.memory_space<vmem>>, %arg4: memref<1x128xf32, #tpu.memory_space<vmem>>, %arg5: memref<1x128xf32, #tpu.memory_space<vmem>>, %arg6: memref<1x128xf32, #tpu.memory_space<vmem>>, %arg7: memref<128x128xf32, #tpu.memory_space<vmem>>, %arg8: memref<1x128xf32, #tpu.memory_space<vmem>>, %arg9: memref<1x128xf32, #tpu.memory_space<vmem>>, %arg10: memref<1x128xf32, #tpu.memory_space<vmem>>, %arg11: memref<128x128xf32, #tpu.memory_space<vmem>>, %arg12: memref<1x128xf32, #tpu.memory_space<vmem>>, %arg13: memref<128x128xf32, #tpu.memory_space<vmem>>) attributes {dimension_semantics = [#tpu.dimension_semantics<parallel>], iteration_bounds = array<i64: 2>, scalar_prefetch = 1 : i64, scratch_operands = 0 : i64, tpu.core_type = #tpu.core_type<tc>, window_params = [{transform_indices = @transform_0, window_bounds = array<i64: 128, 128>}, {pipeline_mode = #tpu.pipeline_mode<synchronous>, transform_indices = @transform_1, window_bounds = array<i64: 128, 128>}, {pipeline_mode = #tpu.pipeline_mode<synchronous>, transform_indices = @transform_2, window_bounds = array<i64: 1, 128>}, {pipeline_mode = #tpu.pipeline_mode<synchronous>, transform_indices = @transform_3, window_bounds = array<i64: 1, 128>}, {pipeline_mode = #tpu.pipeline_mode<synchronous>, transform_indices = @transform_4, window_bounds = array<i64: 1, 128>}, {pipeline_mode = #tpu.pipeline_mode<synchronous>, transform_indices = @transform_5, window_bounds = array<i64: 128, 128>}, {pipeline_mode = #tpu.pipeline_mode<synchronous>, transform_indices = @transform_6, window_bounds = array<i64: 1, 128>}, {pipeline_mode = #tpu.pipeline_mode<synchronous>, transform_indices = @transform_7, window_bounds = array<i64: 1, 128>}, {pipeline_mode = #tpu.pipeline_mode<synchronous>, transform_indices = @transform_8, window_bounds = array<i64: 1, 128>}, {pipeline_mode = #tpu.pipeline_mode<synchronous>, transform_indices = @transform_9, window_bounds = array<i64: 128, 128>}, {pipeline_mode = #tpu.pipeline_mode<synchronous>, transform_indices = @transform_10, window_bounds = array<i64: 1, 128>}, {transform_indices = @transform_11, window_bounds = array<i64: 128, 128>}]} {
    %c0 = arith.constant 0 : index
    %c0_0 = arith.constant 0 : index
    %0 = vector.load %arg2[%c0, %c0_0] : memref<128x128xf32, #tpu.memory_space<vmem>>, vector<128x128xf32>
    %c0_1 = arith.constant 0 : index
    %c0_2 = arith.constant 0 : index
    %1 = vector.load %arg3[%c0_1, %c0_2] : memref<128x128xf32, #tpu.memory_space<vmem>>, vector<128x128xf32>
    %cst = arith.constant dense<0.000000e+00> : vector<128x128xf32>
    %2 = tpu.matmul %0, %1, %cst {dimension_numbers = #tpu.dot_dimension_numbers<[1], [0], [0], [1], [0, 0, 1, 1], [], []>} : vector<128x128xf32>, vector<128x128xf32>, vector<128x128xf32> -> vector<128x128xf32>
    %c0_3 = arith.constant 0 : index
    %c0_4 = arith.constant 0 : index
    %3 = vector.load %arg4[%c0_3, %c0_4] : memref<1x128xf32, #tpu.memory_space<vmem>>, vector<1x128xf32>
    %4 = vector.broadcast %3 : vector<1x128xf32> to vector<128x128xf32>
    %5 = arith.addf %2, %4 : vector<128x128xf32>
    %c0_5 = arith.constant 0 : index
    %c0_6 = arith.constant 0 : index
    %6 = vector.load %arg5[%c0_5, %c0_6] : memref<1x128xf32, #tpu.memory_space<vmem>>, vector<1x128xf32>
    %c0_7 = arith.constant 0 : index
    %c0_8 = arith.constant 0 : index
    %7 = vector.load %arg6[%c0_7, %c0_8] : memref<1x128xf32, #tpu.memory_space<vmem>>, vector<1x128xf32>
    %cst_9 = arith.constant dense<0.000000e+00> : vector<128xf32>
    %8 = vector.multi_reduction <add>, %5, %cst_9 [1] : vector<128x128xf32> to vector<128xf32>
    %9 = vector.shape_cast %8 : vector<128xf32> to vector<128x1xf32>
    %cst_10 = arith.constant 1.562500e-02 : f32
    %10 = vector.broadcast %cst_10 : f32 to vector<128x1xf32>
    %11 = arith.mulf %9, %10 : vector<128x1xf32>
    %12 = tpu.iota {dimensions = array<i32: 1>} : vector<128x128xi32>
    %c64_i32 = arith.constant 64 : i32
    %13 = vector.broadcast %c64_i32 : i32 to vector<128x128xi32>
    %14 = arith.cmpi slt, %12, %13 : vector<128x128xi32>
    %15 = vector.broadcast %11 : vector<128x1xf32> to vector<128x128xf32>
    %16 = arith.subf %5, %15 : vector<128x128xf32>
    %cst_11 = arith.constant 0.000000e+00 : f32
    %17 = vector.broadcast %cst_11 : f32 to vector<128x128xf32>
    %18 = arith.select %14, %16, %17 : vector<128x128xi1>, vector<128x128xf32>
    %19 = arith.mulf %18, %18 : vector<128x128xf32>
    %cst_12 = arith.constant dense<0.000000e+00> : vector<128xf32>
    %20 = vector.multi_reduction <add>, %19, %cst_12 [1] : vector<128x128xf32> to vector<128xf32>
    %21 = vector.shape_cast %20 : vector<128xf32> to vector<128x1xf32>
    %cst_13 = arith.constant 1.562500e-02 : f32
    %22 = vector.broadcast %cst_13 : f32 to vector<128x1xf32>
    %23 = arith.mulf %21, %22 : vector<128x1xf32>
    %cst_14 = arith.constant 9.99999974E-6 : f32
    %24 = vector.broadcast %cst_14 : f32 to vector<128x1xf32>
    %25 = arith.addf %23, %24 : vector<128x1xf32>
    %26 = math.rsqrt %25 : vector<128x1xf32>
    %27 = vector.broadcast %26 : vector<128x1xf32> to vector<128x128xf32>
    %28 = arith.mulf %18, %27 : vector<128x128xf32>
    %29 = vector.broadcast %6 : vector<1x128xf32> to vector<128x128xf32>
    %30 = arith.mulf %28, %29 : vector<128x128xf32>
    %31 = vector.broadcast %7 : vector<1x128xf32> to vector<128x128xf32>
    %32 = arith.addf %30, %31 : vector<128x128xf32>
    %cst_15 = arith.constant 0.000000e+00 : f32
    %33 = vector.broadcast %cst_15 : f32 to vector<128x128xf32>
    %34 = arith.maximumf %32, %33 : vector<128x128xf32>
    %c0_16 = arith.constant 0 : index
    %c0_17 = arith.constant 0 : index
    %35 = vector.load %arg7[%c0_16, %c0_17] : memref<128x128xf32, #tpu.memory_space<vmem>>, vector<128x128xf32>
    %cst_18 = arith.constant dense<0.000000e+00> : vector<128x128xf32>
    %36 = tpu.matmul %34, %35, %cst_18 {dimension_numbers = #tpu.dot_dimension_numbers<[1], [0], [0], [1], [0, 0, 1, 1], [], []>} : vector<128x128xf32>, vector<128x128xf32>, vector<128x128xf32> -> vector<128x128xf32>
    %c0_19 = arith.constant 0 : index
    %c0_20 = arith.constant 0 : index
    %37 = vector.load %arg8[%c0_19, %c0_20] : memref<1x128xf32, #tpu.memory_space<vmem>>, vector<1x128xf32>
    %38 = vector.broadcast %37 : vector<1x128xf32> to vector<128x128xf32>
    %39 = arith.addf %36, %38 : vector<128x128xf32>
    %c0_21 = arith.constant 0 : index
    %c0_22 = arith.constant 0 : index
    %40 = vector.load %arg9[%c0_21, %c0_22] : memref<1x128xf32, #tpu.memory_space<vmem>>, vector<1x128xf32>
    %c0_23 = arith.constant 0 : index
    %c0_24 = arith.constant 0 : index
    %41 = vector.load %arg10[%c0_23, %c0_24] : memref<1x128xf32, #tpu.memory_space<vmem>>, vector<1x128xf32>
    %cst_25 = arith.constant dense<0.000000e+00> : vector<128xf32>
    %42 = vector.multi_reduction <add>, %39, %cst_25 [1] : vector<128x128xf32> to vector<128xf32>
    %43 = vector.shape_cast %42 : vector<128xf32> to vector<128x1xf32>
    %cst_26 = arith.constant 1.562500e-02 : f32
    %44 = vector.broadcast %cst_26 : f32 to vector<128x1xf32>
    %45 = arith.mulf %43, %44 : vector<128x1xf32>
    %46 = tpu.iota {dimensions = array<i32: 1>} : vector<128x128xi32>
    %c64_i32_27 = arith.constant 64 : i32
    %47 = vector.broadcast %c64_i32_27 : i32 to vector<128x128xi32>
    %48 = arith.cmpi slt, %46, %47 : vector<128x128xi32>
    %49 = vector.broadcast %45 : vector<128x1xf32> to vector<128x128xf32>
    %50 = arith.subf %39, %49 : vector<128x128xf32>
    %cst_28 = arith.constant 0.000000e+00 : f32
    %51 = vector.broadcast %cst_28 : f32 to vector<128x128xf32>
    %52 = arith.select %48, %50, %51 : vector<128x128xi1>, vector<128x128xf32>
    %53 = arith.mulf %52, %52 : vector<128x128xf32>
    %cst_29 = arith.constant dense<0.000000e+00> : vector<128xf32>
    %54 = vector.multi_reduction <add>, %53, %cst_29 [1] : vector<128x128xf32> to vector<128xf32>
    %55 = vector.shape_cast %54 : vector<128xf32> to vector<128x1xf32>
    %cst_30 = arith.constant 1.562500e-02 : f32
    %56 = vector.broadcast %cst_30 : f32 to vector<128x1xf32>
    %57 = arith.mulf %55, %56 : vector<128x1xf32>
    %cst_31 = arith.constant 9.99999974E-6 : f32
    %58 = vector.broadcast %cst_31 : f32 to vector<128x1xf32>
    %59 = arith.addf %57, %58 : vector<128x1xf32>
    %60 = math.rsqrt %59 : vector<128x1xf32>
    %61 = vector.broadcast %60 : vector<128x1xf32> to vector<128x128xf32>
    %62 = arith.mulf %52, %61 : vector<128x128xf32>
    %63 = vector.broadcast %40 : vector<1x128xf32> to vector<128x128xf32>
    %64 = arith.mulf %62, %63 : vector<128x128xf32>
    %65 = vector.broadcast %41 : vector<1x128xf32> to vector<128x128xf32>
    %66 = arith.addf %64, %65 : vector<128x128xf32>
    %cst_32 = arith.constant 0.000000e+00 : f32
    %67 = vector.broadcast %cst_32 : f32 to vector<128x128xf32>
    %68 = arith.maximumf %66, %67 : vector<128x128xf32>
    %c0_33 = arith.constant 0 : index
    %c0_34 = arith.constant 0 : index
    %69 = vector.load %arg11[%c0_33, %c0_34] : memref<128x128xf32, #tpu.memory_space<vmem>>, vector<128x128xf32>
    %cst_35 = arith.constant dense<0.000000e+00> : vector<128x128xf32>
    %70 = tpu.matmul %68, %69, %cst_35 {dimension_numbers = #tpu.dot_dimension_numbers<[1], [0], [0], [1], [0, 0, 1, 1], [], []>} : vector<128x128xf32>, vector<128x128xf32>, vector<128x128xf32> -> vector<128x128xf32>
    %c0_36 = arith.constant 0 : index
    %c0_37 = arith.constant 0 : index
    %71 = vector.load %arg12[%c0_36, %c0_37] : memref<1x128xf32, #tpu.memory_space<vmem>>, vector<1x128xf32>
    %72 = vector.broadcast %71 : vector<1x128xf32> to vector<128x128xf32>
    %73 = arith.addf %70, %72 : vector<128x128xf32>
    %c0_38 = arith.constant 0 : index
    %c0_39 = arith.constant 0 : index
    %74 = vector.load %arg13[%c0_38, %c0_39] : memref<128x128xf32, #tpu.memory_space<vmem>>, vector<128x128xf32>
    tpu.vector_store %arg13[%c0_38, %c0_39], %73 {strides = array<i32>} : memref<128x128xf32, #tpu.memory_space<vmem>>, vector<128x128xf32>,
    return
  }
  func.func @transform_0(%arg0: i32, %arg1: memref<1xi32, #tpu.memory_space<smem>>) -> (i32, i32) {
    %c0_i32 = arith.constant 0 : i32
    %c0_i32_0 = arith.constant 0 : i32
    return %arg0, %c0_i32 : i32, i32
  }
  func.func @transform_1(%arg0: i32, %arg1: memref<1xi32, #tpu.memory_space<smem>>) -> (i32, i32) {
    %c0_i32 = arith.constant 0 : i32
    %c0_i32_0 = arith.constant 0 : i32
    %c0_i32_1 = arith.constant 0 : i32
    return %c0_i32, %c0_i32_0 : i32, i32
  }
  func.func @transform_2(%arg0: i32, %arg1: memref<1xi32, #tpu.memory_space<smem>>) -> (i32, i32) {
    %c0_i32 = arith.constant 0 : i32
    %c0_i32_0 = arith.constant 0 : i32
    %c0_i32_1 = arith.constant 0 : i32
    return %c0_i32, %c0_i32_0 : i32, i32
  }
  func.func @transform_3(%arg0: i32, %arg1: memref<1xi32, #tpu.memory_space<smem>>) -> (i32, i32) {
    %c0_i32 = arith.constant 0 : i32
    %c0_i32_0 = arith.constant 0 : i32
    %c0_i32_1 = arith.constant 0 : i32
    return %c0_i32, %c0_i32_0 : i32, i32
  }
  func.func @transform_4(%arg0: i32, %arg1: memref<1xi32, #tpu.memory_space<smem>>) -> (i32, i32) {
    %c0_i32 = arith.constant 0 : i32
    %c0_i32_0 = arith.constant 0 : i32
    %c0_i32_1 = arith.constant 0 : i32
    return %c0_i32, %c0_i32_0 : i32, i32
  }
  func.func @transform_5(%arg0: i32, %arg1: memref<1xi32, #tpu.memory_space<smem>>) -> (i32, i32) {
    %c0_i32 = arith.constant 0 : i32
    %c0_i32_0 = arith.constant 0 : i32
    %c0_i32_1 = arith.constant 0 : i32
    return %c0_i32, %c0_i32_0 : i32, i32
  }
  func.func @transform_6(%arg0: i32, %arg1: memref<1xi32, #tpu.memory_space<smem>>) -> (i32, i32) {
    %c0_i32 = arith.constant 0 : i32
    %c0_i32_0 = arith.constant 0 : i32
    %c0_i32_1 = arith.constant 0 : i32
    return %c0_i32, %c0_i32_0 : i32, i32
  }
  func.func @transform_7(%arg0: i32, %arg1: memref<1xi32, #tpu.memory_space<smem>>) -> (i32, i32) {
    %c0_i32 = arith.constant 0 : i32
    %c0_i32_0 = arith.constant 0 : i32
    %c0_i32_1 = arith.constant 0 : i32
    return %c0_i32, %c0_i32_0 : i32, i32
  }
  func.func @transform_8(%arg0: i32, %arg1: memref<1xi32, #tpu.memory_space<smem>>) -> (i32, i32) {
    %c0_i32 = arith.constant 0 : i32
    %c0_i32_0 = arith.constant 0 : i32
    %c0_i32_1 = arith.constant 0 : i32
    return %c0_i32, %c0_i32_0 : i32, i32
  }
  func.func @transform_9(%arg0: i32, %arg1: memref<1xi32, #tpu.memory_space<smem>>) -> (i32, i32) {
    %c0_i32 = arith.constant 0 : i32
    %c0_i32_0 = arith.constant 0 : i32
    %c0_i32_1 = arith.constant 0 : i32
    return %c0_i32, %c0_i32_0 : i32, i32
  }
  func.func @transform_10(%arg0: i32, %arg1: memref<1xi32, #tpu.memory_space<smem>>) -> (i32, i32) {
    %c0_i32 = arith.constant 0 : i32
    %c0_i32_0 = arith.constant 0 : i32
    %c0_i32_1 = arith.constant 0 : i32
    return %c0_i32, %c0_i32_0 : i32, i32
  }
  func.func @transform_11(%arg0: i32, %arg1: memref<1xi32, #tpu.memory_space<smem>>) -> (i32, i32) {
    %c0_i32 = arith.constant 0 : i32
    %c0_i32_0 = arith.constant 0 : i32
    return %arg0, %c0_i32 : i32, i32
  }
}

</mosaic_0001>

<llo_original>
// kernel: mlp3_dropout_layernorm.1
$region0: #{mlp3_dropout_layernorm.1}
  #allocation0 [shape = 'u32[]', space=smem, size = 0x4, offset = 0x4, fixed_abs, tag = 'smem constant byte address 0x4 - core index']
  #allocation1 [shape = 'u32[144,128]{1,0:T(1,128)}', space=vmem, size = 0x12000, scoped, tag = 'internal scratch']
  #allocation2 [shape = 's32[1]{0}', space=sflag, size = 0x4, scoped, tag = 'scoped memory for mlp3_dropout_layernorm.1']
  #allocation3 [shape = 's32[1]{0:T(128)S(6)}', space=smem, size = 0x200, scoped, tag = 'prefetched SMEM operand 0']
  %s0 = inlined_call_operand.<no memory space> [shape: s32[1], index: 0, kind: input, shape index: {}]
  %s1 = inlined_call_operand.vmem [shape: f32[256,128], index: 1, kind: input, shape index: {}]
  %s2 = inlined_call_operand.vmem [shape: f32[128,128], index: 2, kind: input, shape index: {}]
  %s3 = inlined_call_operand.vmem [shape: f32[1,128], index: 3, kind: input, shape index: {}]
  %s4 = inlined_call_operand.vmem [shape: f32[1,128], index: 4, kind: input, shape index: {}]
  %s5 = inlined_call_operand.vmem [shape: f32[1,128], index: 5, kind: input, shape index: {}]
  %s6 = inlined_call_operand.vmem [shape: f32[128,128], index: 6, kind: input, shape index: {}]
  %s7 = inlined_call_operand.vmem [shape: f32[1,128], index: 7, kind: input, shape index: {}]
  %s8 = inlined_call_operand.vmem [shape: f32[1,128], index: 8, kind: input, shape index: {}]
  %s9 = inlined_call_operand.vmem [shape: f32[1,128], index: 9, kind: input, shape index: {}]
  %s10 = inlined_call_operand.vmem [shape: f32[128,128], index: 10, kind: input, shape index: {}]
  %s11 = inlined_call_operand.vmem [shape: f32[1,128], index: 11, kind: input, shape index: {}]
  %s12 = inlined_call_operand.vmem [shape: f32[256,128], index: 12, kind: output, shape index: {}]
  %s13 = sld [smem:[#allocation0]]
  $region77: #{mlp3_dropout_layernorm.1} parent=0
    _
  %s15 = ssub.s32 1, %s13
  %s16 = scalar_select 0, %s15, %s13
  %17 = sst [smem:[#allocation3]] %s0
  loop: start=0, step=1, limit=4
  $region2: #{mlp3_dropout_layernorm.1} parent=0 // loop_pre_header
    _
  $region3: #{mlp3_dropout_layernorm.1} parent=0 // loop_header
    %s19 = sphi 0, %s23
    %p20 = scmp.ge.s32.totalorder %s19, 4
    %s29 = sphi 0, %s31
    %s32 = sphi 0, %s29
    %s33 = sphi 0, %s32
    %s49 = sphi 0, %s33
    %s53 = sphi 0, %s53
    %s55 = sphi 0, %s53
    %s56 = sphi 0, %s55
    %s70 = sphi 0, %s56
    %s74 = sphi 0, %s74
    %s76 = sphi 0, %s74
    %s77 = sphi 0, %s76
    %s91 = sphi 0, %s77
    %s95 = sphi 0, %s95
    %s97 = sphi 0, %s95
    %s98 = sphi 0, %s97
    %s112 = sphi 0, %s98
    %s116 = sphi 0, %s116
    %s118 = sphi 0, %s116
    %s119 = sphi 0, %s118
    %s133 = sphi 0, %s119
    %s137 = sphi 0, %s137
    %s139 = sphi 0, %s137
    %s140 = sphi 0, %s139
    %s154 = sphi 0, %s140
    %s158 = sphi 0, %s158
    %s160 = sphi 0, %s158
    %s161 = sphi 0, %s160
    %s175 = sphi 0, %s161
    %s179 = sphi 0, %s179
    %s181 = sphi 0, %s179
    %s182 = sphi 0, %s181
    %s196 = sphi 0, %s182
    %s200 = sphi 0, %s200
    %s202 = sphi 0, %s200
    %s203 = sphi 0, %s202
    %s217 = sphi 0, %s203
    %s221 = sphi 0, %s221
    %s223 = sphi 0, %s221
    %s224 = sphi 0, %s223
    %s238 = sphi 0, %s224
    %s242 = sphi 0, %s242
    %s244 = sphi 0, %s242
    %s245 = sphi 0, %s244
    %s259 = sphi 0, %s245
    %s265 = sphi 0, %s267
    %s268 = sphi 0, %s265
    %s269 = sphi 0, %s268
    %s285 = sphi 0, %s269
  $region4: #{mlp3_dropout_layernorm.1} parent=0 // loop_header_branch
    %22 = sbr.rel (%p20) target = $region8
  $region5: #{mlp3_dropout_layernorm.1} parent=0 // loop_body
    %s24 = ssub.s32 %s19, 1
    %s25 = ssub.s32 %s19, 2
    %s26 = sadd.s32 %s19, 1
    %s27 = ssub.s32 %s19, %s26
    %p28 = scmp.eq.s32.totalorder %s27, 0
    %s30 = sadd.s32 %s29, 1
    %s31 = scalar_select %p28, %s29, %s30
    %p34 = pneg %p28
    %p35 = scmp.eq.s32.totalorder %s19, 1
    %p36 = por %p34, %p35
    %p37 = scmp.ne.s32.totalorder %s29, %s32
    %p38 = scmp.eq.s32.totalorder %s19, 0
    %p39 = por %p37, %p38
    %p40 = scmp.ne.s32.totalorder %s29, %s32
    %p41 = scmp.eq.s32.totalorder %s24, 1
    %p42 = por %p40, %p41
    %p43 = scmp.ne.s32.totalorder %s32, %s33
    %p44 = scmp.eq.s32.totalorder %s24, 0
    %p45 = por %p43, %p44
    %p46 = scmp.ne.s32.totalorder %s32, %s33
    %p47 = scmp.eq.s32.totalorder %s25, 1
    %p48 = por %p46, %p47
    %p50 = scmp.ne.s32.totalorder %s33, %s49
    %p51 = scmp.eq.s32.totalorder %s25, 0
    %p52 = por %p50, %p51
    %s54 = sadd.s32 %s53, 1
    %p57 = scmp.eq.s32.totalorder %s19, 1
    %p58 = scmp.ne.s32.totalorder %s53, %s55
    %p59 = scmp.eq.s32.totalorder %s19, 0
    %p60 = por %p58, %p59
    %p61 = scmp.ne.s32.totalorder %s53, %s55
    %p62 = scmp.eq.s32.totalorder %s24, 1
    %p63 = por %p61, %p62
    %p64 = scmp.ne.s32.totalorder %s55, %s56
    %p65 = scmp.eq.s32.totalorder %s24, 0
    %p66 = por %p64, %p65
    %p67 = scmp.ne.s32.totalorder %s55, %s56
    %p68 = scmp.eq.s32.totalorder %s25, 1
    %p69 = por %p67, %p68
    %p71 = scmp.ne.s32.totalorder %s56, %s70
    %p72 = scmp.eq.s32.totalorder %s25, 0
    %p73 = por %p71, %p72
    %s75 = sadd.s32 %s74, 1
    %p78 = scmp.eq.s32.totalorder %s19, 1
    %p79 = scmp.ne.s32.totalorder %s74, %s76
    %p80 = scmp.eq.s32.totalorder %s19, 0
    %p81 = por %p79, %p80
    %p82 = scmp.ne.s32.totalorder %s74, %s76
    %p83 = scmp.eq.s32.totalorder %s24, 1
    %p84 = por %p82, %p83
    %p85 = scmp.ne.s32.totalorder %s76, %s77
    %p86 = scmp.eq.s32.totalorder %s24, 0
    %p87 = por %p85, %p86
    %p88 = scmp.ne.s32.totalorder %s76, %s77
    %p89 = scmp.eq.s32.totalorder %s25, 1
    %p90 = por %p88, %p89
    %p92 = scmp.ne.s32.totalorder %s77, %s91
    %p93 = scmp.eq.s32.totalorder %s25, 0
    %p94 = por %p92, %p93
    %s96 = sadd.s32 %s95, 1
    %p99 = scmp.eq.s32.totalorder %s19, 1
    %p100 = scmp.ne.s32.totalorder %s95, %s97
    %p101 = scmp.eq.s32.totalorder %s19, 0
    %p102 = por %p100, %p101
    %p103 = scmp.ne.s32.totalorder %s95, %s97
    %p104 = scmp.eq.s32.totalorder %s24, 1
    %p105 = por %p103, %p104
    %p106 = scmp.ne.s32.totalorder %s97, %s98
    %p107 = scmp.eq.s32.totalorder %s24, 0
    %p108 = por %p106, %p107
    %p109 = scmp.ne.s32.totalorder %s97, %s98
    %p110 = scmp.eq.s32.totalorder %s25, 1
    %p111 = por %p109, %p110
    %p113 = scmp.ne.s32.totalorder %s98, %s112
    %p114 = scmp.eq.s32.totalorder %s25, 0
    %p115 = por %p113, %p114
    %s117 = sadd.s32 %s116, 1
    %p120 = scmp.eq.s32.totalorder %s19, 1
    %p121 = scmp.ne.s32.totalorder %s116, %s118
    %p122 = scmp.eq.s32.totalorder %s19, 0
    %p123 = por %p121, %p122
    %p124 = scmp.ne.s32.totalorder %s116, %s118
    %p125 = scmp.eq.s32.totalorder %s24, 1
    %p126 = por %p124, %p125
    %p127 = scmp.ne.s32.totalorder %s118, %s119
    %p128 = scmp.eq.s32.totalorder %s24, 0
    %p129 = por %p127, %p128
    %p130 = scmp.ne.s32.totalorder %s118, %s119
    %p131 = scmp.eq.s32.totalorder %s25, 1
    %p132 = por %p130, %p131
    %p134 = scmp.ne.s32.totalorder %s119, %s133
    %p135 = scmp.eq.s32.totalorder %s25, 0
    %p136 = por %p134, %p135
    %s138 = sadd.s32 %s137, 1
    %p141 = scmp.eq.s32.totalorder %s19, 1
    %p142 = scmp.ne.s32.totalorder %s137, %s139
    %p143 = scmp.eq.s32.totalorder %s19, 0
    %p144 = por %p142, %p143
    %p145 = scmp.ne.s32.totalorder %s137, %s139
    %p146 = scmp.eq.s32.totalorder %s24, 1
    %p147 = por %p145, %p146
    %p148 = scmp.ne.s32.totalorder %s139, %s140
    %p149 = scmp.eq.s32.totalorder %s24, 0
    %p150 = por %p148, %p149
    %p151 = scmp.ne.s32.totalorder %s139, %s140
    %p152 = scmp.eq.s32.totalorder %s25, 1
    %p153 = por %p151, %p152
    %p155 = scmp.ne.s32.totalorder %s140, %s154
    %p156 = scmp.eq.s32.totalorder %s25, 0
    %p157 = por %p155, %p156
    %s159 = sadd.s32 %s158, 1
    %p162 = scmp.eq.s32.totalorder %s19, 1
    %p163 = scmp.ne.s32.totalorder %s158, %s160
    %p164 = scmp.eq.s32.totalorder %s19, 0
    %p165 = por %p163, %p164
    %p166 = scmp.ne.s32.totalorder %s158, %s160
    %p167 = scmp.eq.s32.totalorder %s24, 1
    %p168 = por %p166, %p167
    %p169 = scmp.ne.s32.totalorder %s160, %s161
    %p170 = scmp.eq.s32.totalorder %s24, 0
    %p171 = por %p169, %p170
    %p172 = scmp.ne.s32.totalorder %s160, %s161
    %p173 = scmp.eq.s32.totalorder %s25, 1
    %p174 = por %p172, %p173
    %p176 = scmp.ne.s32.totalorder %s161, %s175
    %p177 = scmp.eq.s32.totalorder %s25, 0
    %p178 = por %p176, %p177
    %s180 = sadd.s32 %s179, 1
    %p183 = scmp.eq.s32.totalorder %s19, 1
    %p184 = scmp.ne.s32.totalorder %s179, %s181
    %p185 = scmp.eq.s32.totalorder %s19, 0
    %p186 = por %p184, %p185
    %p187 = scmp.ne.s32.totalorder %s179, %s181
    %p188 = scmp.eq.s32.totalorder %s24, 1
    %p189 = por %p187, %p188
    %p190 = scmp.ne.s32.totalorder %s181, %s182
    %p191 = scmp.eq.s32.totalorder %s24, 0
    %p192 = por %p190, %p191
    %p193 = scmp.ne.s32.totalorder %s181, %s182
    %p194 = scmp.eq.s32.totalorder %s25, 1
    %p195 = por %p193, %p194
    %p197 = scmp.ne.s32.totalorder %s182, %s196
    %p198 = scmp.eq.s32.totalorder %s25, 0
    %p199 = por %p197, %p198
    %s201 = sadd.s32 %s200, 1
    %p204 = scmp.eq.s32.totalorder %s19, 1
    %p205 = scmp.ne.s32.totalorder %s200, %s202
    %p206 = scmp.eq.s32.totalorder %s19, 0
    %p207 = por %p205, %p206
    %p208 = scmp.ne.s32.totalorder %s200, %s202
    %p209 = scmp.eq.s32.totalorder %s24, 1
    %p210 = por %p208, %p209
    %p211 = scmp.ne.s32.totalorder %s202, %s203
    %p212 = scmp.eq.s32.totalorder %s24, 0
    %p213 = por %p211, %p212
    %p214 = scmp.ne.s32.totalorder %s202, %s203
    %p215 = scmp.eq.s32.totalorder %s25, 1
    %p216 = por %p214, %p215
    %p218 = scmp.ne.s32.totalorder %s203, %s217
    %p219 = scmp.eq.s32.totalorder %s25, 0
    %p220 = por %p218, %p219
    %s222 = sadd.s32 %s221, 1
    %p225 = scmp.eq.s32.totalorder %s19, 1
    %p226 = scmp.ne.s32.totalorder %s221, %s223
    %p227 = scmp.eq.s32.totalorder %s19, 0
    %p228 = por %p226, %p227
    %p229 = scmp.ne.s32.totalorder %s221, %s223
    %p230 = scmp.eq.s32.totalorder %s24, 1
    %p231 = por %p229, %p230
    %p232 = scmp.ne.s32.totalorder %s223, %s224
    %p233 = scmp.eq.s32.totalorder %s24, 0
    %p234 = por %p232, %p233
    %p235 = scmp.ne.s32.totalorder %s223, %s224
    %p236 = scmp.eq.s32.totalorder %s25, 1
    %p237 = por %p235, %p236
    %p239 = scmp.ne.s32.totalorder %s224, %s238
    %p240 = scmp.eq.s32.totalorder %s25, 0
    %p241 = por %p239, %p240
    %s243 = sadd.s32 %s242, 1
    %p246 = scmp.eq.s32.totalorder %s19, 1
    %p247 = scmp.ne.s32.totalorder %s242, %s244
    %p248 = scmp.eq.s32.totalorder %s19, 0
    %p249 = por %p247, %p248
    %p250 = scmp.ne.s32.totalorder %s242, %s244
    %p251 = scmp.eq.s32.totalorder %s24, 1
    %p252 = por %p250, %p251
    %p253 = scmp.ne.s32.totalorder %s244, %s245
    %p254 = scmp.eq.s32.totalorder %s24, 0
    %p255 = por %p253, %p254
    %p256 = scmp.ne.s32.totalorder %s244, %s245
    %p257 = scmp.eq.s32.totalorder %s25, 1
    %p258 = por %p256, %p257
    %p260 = scmp.ne.s32.totalorder %s245, %s259
    %p261 = scmp.eq.s32.totalorder %s25, 0
    %p262 = por %p260, %p261
    %s263 = ssub.s32 %s19, %s26
    %p264 = scmp.eq.s32.totalorder %s263, 0
    %s266 = sadd.s32 %s265, 1
    %s267 = scalar_select %p264, %s265, %s266
    %p270 = pneg %p264
    %p271 = scmp.eq.s32.totalorder %s19, 1
    %p272 = por %p270, %p271
    %p273 = scmp.ne.s32.totalorder %s265, %s268
    %p274 = scmp.eq.s32.totalorder %s19, 0
    %p275 = por %p273, %p274
    %p276 = scmp.ne.s32.totalorder %s265, %s268
    %p277 = scmp.eq.s32.totalorder %s24, 1
    %p278 = por %p276, %p277
    %p279 = scmp.ne.s32.totalorder %s268, %s269
    %p280 = scmp.eq.s32.totalorder %s24, 0
    %p281 = por %p279, %p280
    %p282 = scmp.ne.s32.totalorder %s268, %s269
    %p283 = scmp.eq.s32.totalorder %s25, 1
    %p284 = por %p282, %p283
    %p286 = scmp.ne.s32.totalorder %s269, %s285
    %p287 = scmp.eq.s32.totalorder %s25, 0
    %p288 = por %p286, %p287
    %p289 = scmp.le.s32.totalorder 1, %s19
    %p290 = scmp.lt.s32.totalorder %s19, 3
    %p291 = pnand %p289, %p290
    %p292 = pneg %p291
    // Predicated region
    $region9: #{mlp3_dropout_layernorm.1} parent=5 // pred_check
      _
    $region10: #{mlp3_dropout_layernorm.1} parent=5 // pred_check_branch
      %294 = sbr.rel (%p291) target = $region12
    $region11: #{mlp3_dropout_layernorm.1} parent=5 // pred_region
      %s295 = ssub.s32 %s19, 1
      // Predicated region
      $region13: #{mlp3_dropout_layernorm.1} parent=11 // pred_check
        %p296 = pneg %p66
      $region14: #{mlp3_dropout_layernorm.1} parent=11 // pred_check_branch
        %298 = sbr.rel (%p296) target = $region16
      $region15: #{mlp3_dropout_layernorm.1} parent=11 // pred_region
        _
      $region16: #{mlp3_dropout_layernorm.1} parent=11 // pred_fallthru
        _
      // Predicated region
      $region17: #{mlp3_dropout_layernorm.1} parent=11 // pred_check
        %p299 = pneg %p87
      $region18: #{mlp3_dropout_layernorm.1} parent=11 // pred_check_branch
        %301 = sbr.rel (%p299) target = $region20
      $region19: #{mlp3_dropout_layernorm.1} parent=11 // pred_region
        _
      $region20: #{mlp3_dropout_layernorm.1} parent=11 // pred_fallthru
        _
      // Predicated region
      $region21: #{mlp3_dropout_layernorm.1} parent=11 // pred_check
        %p302 = pneg %p108
      $region22: #{mlp3_dropout_layernorm.1} parent=11 // pred_check_branch
        %304 = sbr.rel (%p302) target = $region24
      $region23: #{mlp3_dropout_layernorm.1} parent=11 // pred_region
        _
      $region24: #{mlp3_dropout_layernorm.1} parent=11 // pred_fallthru
        _
      // Predicated region
      $region25: #{mlp3_dropout_layernorm.1} parent=11 // pred_check
        %p305 = pneg %p129
      $region26: #{mlp3_dropout_layernorm.1} parent=11 // pred_check_branch
        %307 = sbr.rel (%p305) target = $region28
      $region27: #{mlp3_dropout_layernorm.1} parent=11 // pred_region
        _
      $region28: #{mlp3_dropout_layernorm.1} parent=11 // pred_fallthru
        _
      // Predicated region
      $region29: #{mlp3_dropout_layernorm.1} parent=11 // pred_check
        %p308 = pneg %p150
      $region30: #{mlp3_dropout_layernorm.1} parent=11 // pred_check_branch
        %310 = sbr.rel (%p308) target = $region32
      $region31: #{mlp3_dropout_layernorm.1} parent=11 // pred_region
        _
      $region32: #{mlp3_dropout_layernorm.1} parent=11 // pred_fallthru
        _
      // Predicated region
      $region33: #{mlp3_dropout_layernorm.1} parent=11 // pred_check
        %p311 = pneg %p171
      $region34: #{mlp3_dropout_layernorm.1} parent=11 // pred_check_branch
        %313 = sbr.rel (%p311) target = $region36
      $region35: #{mlp3_dropout_layernorm.1} parent=11 // pred_region
        _
      $region36: #{mlp3_dropout_layernorm.1} parent=11 // pred_fallthru
        _
      // Predicated region
      $region37: #{mlp3_dropout_layernorm.1} parent=11 // pred_check
        %p314 = pneg %p192
      $region38: #{mlp3_dropout_layernorm.1} parent=11 // pred_check_branch
        %316 = sbr.rel (%p314) target = $region40
      $region39: #{mlp3_dropout_layernorm.1} parent=11 // pred_region
        _
      $region40: #{mlp3_dropout_layernorm.1} parent=11 // pred_fallthru
        _
      // Predicated region
      $region41: #{mlp3_dropout_layernorm.1} parent=11 // pred_check
        %p317 = pneg %p213
      $region42: #{mlp3_dropout_layernorm.1} parent=11 // pred_check_branch
        %319 = sbr.rel (%p317) target = $region44
      $region43: #{mlp3_dropout_layernorm.1} parent=11 // pred_region
        _
      $region44: #{mlp3_dropout_layernorm.1} parent=11 // pred_fallthru
        _
      // Predicated region
      $region45: #{mlp3_dropout_layernorm.1} parent=11 // pred_check
        %p320 = pneg %p234
      $region46: #{mlp3_dropout_layernorm.1} parent=11 // pred_check_branch
        %322 = sbr.rel (%p320) target = $region48
      $region47: #{mlp3_dropout_layernorm.1} parent=11 // pred_region
        _
      $region48: #{mlp3_dropout_layernorm.1} parent=11 // pred_fallthru
        _
      // Predicated region
      $region49: #{mlp3_dropout_layernorm.1} parent=11 // pred_check
        %p323 = pneg %p255
      $region50: #{mlp3_dropout_layernorm.1} parent=11 // pred_check_branch
        %325 = sbr.rel (%p323) target = $region52
      $region51: #{mlp3_dropout_layernorm.1} parent=11 // pred_region
        _
      $region52: #{mlp3_dropout_layernorm.1} parent=11 // pred_fallthru
        _
    $region12: #{mlp3_dropout_layernorm.1} parent=5 // pred_fallthru
      _
    %p326 = scmp.lt.s32.totalorder %s19, 2
    // Predicated region
    $region53: #{mlp3_dropout_layernorm.1} parent=5 // pred_check
      %p327 = pneg %p326
    $region54: #{mlp3_dropout_layernorm.1} parent=5 // pred_check_branch
      %329 = sbr.rel (%p327) target = $region56
    $region55: #{mlp3_dropout_layernorm.1} parent=5 // pred_region
      // Predicated region
      $region57: #{mlp3_dropout_layernorm.1} parent=55 // pred_check
        %p330 = pneg %p39
      $region58: #{mlp3_dropout_layernorm.1} parent=55 // pred_check_branch
        %332 = sbr.rel (%p330) target = $region60
      $region59: #{mlp3_dropout_layernorm.1} parent=55 // pred_region
        %s333 = smul.u32 16, %s19
        %p334 = scmp.lt.s32.totalorder %s333, 31
        %s335 = scalar_select %p334, %s333, 31
        %s336 = smul.addr %s335, 8
        %s337 = scalar_lea.vmem %s1, %s336
        %s338 = smul.u32 16, %s19
      $region60: #{mlp3_dropout_layernorm.1} parent=55 // pred_fallthru
        _
    $region56: #{mlp3_dropout_layernorm.1} parent=5 // pred_fallthru
      _
    %p339 = scmp.le.s32.totalorder 1, %s19
    %p340 = scmp.lt.s32.totalorder %s19, 3
    %p341 = pnand %p339, %p340
    %p342 = pneg %p341
    // Predicated region
    $region61: #{mlp3_dropout_layernorm.1} parent=5 // pred_check
      _
    $region62: #{mlp3_dropout_layernorm.1} parent=5 // pred_check_branch
      %344 = sbr.rel (%p341) target = $region64
    $region63: #{mlp3_dropout_layernorm.1} parent=5 // pred_region
      %s345 = ssub.s32 %s19, 1
      %s346 = smul.u32 16, %s24
      %p347 = scmp.lt.s32.totalorder %s346, 31
      %s348 = scalar_select %p347, %s346, 31
      %s349 = smul.addr %s348, 8
      %s350 = scalar_lea.vmem %s1, %s349
      %p351 = pneg %p45
      %p352 = pneg %p42
      %p353 = pneg %p66
      %p354 = pneg %p63
      %p355 = pneg %p87
      %p356 = pneg %p84
      %p357 = pneg %p108
      %p358 = pneg %p105
      %p359 = pneg %p129
      %p360 = pneg %p126
      %p361 = pneg %p150
      %p362 = pneg %p147
      %p363 = pneg %p171
      %p364 = pneg %p168
      %p365 = pneg %p192
      %p366 = pneg %p189
      %p367 = pneg %p213
      %p368 = pneg %p210
      %p369 = pneg %p234
      %p370 = pneg %p231
      %p371 = pneg %p255
      %p372 = pneg %p252
      %p373 = pneg %p281
      %p374 = pneg %p278
      %s375 = smul.u32 16, %s24
      %p376 = scmp.lt.s32.totalorder %s375, 31
      %s377 = scalar_select %p376, %s375, 31
      %s378 = smul.addr %s377, 8
      %s379 = scalar_lea.vmem %s12, %s378
      %s380 = smul.u32 16, %s24
      %p381 = scmp.lt.s32.totalorder %s380, 31
      %s382 = scalar_select %p381, %s380, 31
      %s383 = smul.addr %s382, 8
      %s384 = scalar_lea.vmem %s1, %s383
      %s385 = smul.u32 16, %s24
      %s386 = smul.u32 16, %s24
      %p387 = scmp.lt.s32.totalorder %s386, 31
      %s388 = scalar_select %p387, %s386, 31
      %s389 = smul.addr %s388, 8
      %s390 = scalar_lea.vmem %s12, %s389
      %s391 = smul.u32 16, %s24
      %v392 = vld [vmem:[%s384] sm:$0xff]
      %v393 = vld [vmem:[%s384 + $0x8] sm:$0xff]
      %v394 = vld [vmem:[%s384 + $0x10] sm:$0xff]
      %v395 = vld [vmem:[%s384 + $0x18] sm:$0xff]
      %v396 = vld [vmem:[%s384 + $0x20] sm:$0xff]
      %v397 = vld [vmem:[%s384 + $0x28] sm:$0xff]
      %v398 = vld [vmem:[%s384 + $0x30] sm:$0xff]
      %v399 = vld [vmem:[%s384 + $0x38] sm:$0xff]
      %v400 = vld [vmem:[%s384 + $0x40] sm:$0xff]
      %v401 = vld [vmem:[%s384 + $0x48] sm:$0xff]
      %v402 = vld [vmem:[%s384 + $0x50] sm:$0xff]
      %v403 = vld [vmem:[%s384 + $0x58] sm:$0xff]
      %v404 = vld [vmem:[%s384 + $0x60] sm:$0xff]
      %v405 = vld [vmem:[%s384 + $0x68] sm:$0xff]
      %v406 = vld [vmem:[%s384 + $0x70] sm:$0xff]
      %v407 = vld [vmem:[%s384 + $0x78] sm:$0xff]
      %v408 = vld [vmem:[%s2] sm:$0xff]
      %v409 = vld [vmem:[%s2 + $0x8] sm:$0xff]
      %v410 = vld [vmem:[%s2 + $0x10] sm:$0xff]
      %v411 = vld [vmem:[%s2 + $0x18] sm:$0xff]
      %v412 = vld [vmem:[%s2 + $0x20] sm:$0xff]
      %v413 = vld [vmem:[%s2 + $0x28] sm:$0xff]
      %v414 = vld [vmem:[%s2 + $0x30] sm:$0xff]
      %v415 = vld [vmem:[%s2 + $0x38] sm:$0xff]
      %v416 = vld [vmem:[%s2 + $0x40] sm:$0xff]
      %v417 = vld [vmem:[%s2 + $0x48] sm:$0xff]
      %v418 = vld [vmem:[%s2 + $0x50] sm:$0xff]
      %v419 = vld [vmem:[%s2 + $0x58] sm:$0xff]
      %v420 = vld [vmem:[%s2 + $0x60] sm:$0xff]
      %v421 = vld [vmem:[%s2 + $0x68] sm:$0xff]
      %v422 = vld [vmem:[%s2 + $0x70] sm:$0xff]
      %v423 = vld [vmem:[%s2 + $0x78] sm:$0xff]
      %v424 = vld [vmem:[%s3] sm:$0x1]
      %v426 = vlaneseq
      %v427 = vshrl.u32 %v426, 7
      %v428 = vsub.s32 0, %v427
      %v429 = vrot.slane %v424, %v428
      %431 = vmatprep.subr.mxu0 0.0
      %432 = vmatpush1.msra.mxu0 %v423
      %433 = vmatprep.subr.mxu0 0.0
      %434 = vmatpush1.msra.mxu0 %v422
      %435 = vmatprep.subr.mxu0 0.0
      %436 = vmatpush1.msra.mxu0 %v421
      %437 = vmatprep.subr.mxu0 0.0
      %438 = vmatpush1.msra.mxu0 %v420
      %439 = vmatprep.subr.mxu0 0.0
      %440 = vmatpush1.msra.mxu0 %v419
      %441 = vmatprep.subr.mxu0 0.0
      %442 = vmatpush1.msra.mxu0 %v418
      %443 = vmatprep.subr.mxu0 0.0
      %444 = vmatpush1.msra.mxu0 %v417
      %445 = vmatprep.subr.mxu0 0.0
      %446 = vmatpush1.msra.mxu0 %v416
      %447 = vmatprep.subr.mxu0 0.0
      %448 = vmatpush1.msra.mxu0 %v415
      %449 = vmatprep.subr.mxu0 0.0
      %450 = vmatpush1.msra.mxu0 %v414
      %451 = vmatprep.subr.mxu0 0.0
      %452 = vmatpush1.msra.mxu0 %v413
      %453 = vmatprep.subr.mxu0 0.0
      %454 = vmatpush1.msra.mxu0 %v412
      %455 = vmatprep.subr.mxu0 0.0
      %456 = vmatpush1.msra.mxu0 %v411
      %457 = vmatprep.subr.mxu0 0.0
      %458 = vmatpush1.msra.mxu0 %v410
      %459 = vmatprep.subr.mxu0 0.0
      %460 = vmatpush1.msra.mxu0 %v409
      %461 = vmatprep.subr.mxu0 0.0
      %462 = vmatpush1.msra.mxu0 %v408
      %463 = vmatprep.subr.mxu0 0.0
      %464 = vmatpush2.msra.mxu0 0.0
      %465 = vmatprep.subr.mxu0 0.0
      %466 = vmatpush2.msra.mxu0 0.0
      %467 = vmatprep.subr.mxu0 0.0
      %468 = vmatpush2.msra.mxu0 0.0
      %469 = vmatprep.subr.mxu0 0.0
      %470 = vmatpush2.msra.mxu0 0.0
      %471 = vmatprep.subr.mxu0 0.0
      %472 = vmatpush2.msra.mxu0 0.0
      %473 = vmatprep.subr.mxu0 0.0
      %474 = vmatpush2.msra.mxu0 0.0
      %475 = vmatprep.subr.mxu0 0.0
      %476 = vmatpush2.msra.mxu0 0.0
      %477 = vmatprep.subr.mxu0 0.0
      %478 = vmatpush2.msra.mxu0 0.0
      %479 = vmatprep.subr.mxu0 0.0
      %480 = vmatpush2.msra.mxu0 0.0
      %481 = vmatprep.subr.mxu0 0.0
      %482 = vmatpush2.msra.mxu0 0.0
      %483 = vmatprep.subr.mxu0 0.0
      %484 = vmatpush2.msra.mxu0 0.0
      %485 = vmatprep.subr.mxu0 0.0
      %486 = vmatpush2.msra.mxu0 0.0
      %487 = vmatprep.subr.mxu0 0.0
      %488 = vmatpush2.msra.mxu0 0.0
      %489 = vmatprep.subr.mxu0 0.0
      %490 = vmatpush2.msra.mxu0 0.0
      %491 = vmatprep.subr.mxu0 0.0
      %492 = vmatpush2.msra.mxu0 0.0
      %493 = vmatprep.subr.mxu0 0.0
      %494 = vmatpush2.msra.mxu0 0.0
      %495 = vmatprep.mubr.f32.mxu0 0.0
      %496 = vmatmul.mubr.f32.gmra.mxu0 %v392
      %v497 = vpop.f32.mrf.mxu0
      %v498 = vadd.f32 %v429, %v497
      %v499 = vpop.f32.mrf.mxu0
      %500 = vmatprep.mubr.f32.mxu0 0.0
      %501 = vmatmul.mubr.f32.gmra.mxu0 %v393
      %v502 = vpop.f32.mrf.mxu0
      %v503 = vadd.f32 %v429, %v502
      %v504 = vpop.f32.mrf.mxu0
      %505 = vmatprep.mubr.f32.mxu0 0.0
      %506 = vmatmul.mubr.f32.gmra.mxu0 %v394
      %v507 = vpop.f32.mrf.mxu0
      %v508 = vadd.f32 %v429, %v507
      %v509 = vpop.f32.mrf.mxu0
      %510 = vmatprep.mubr.f32.mxu0 0.0
      %511 = vmatmul.mubr.f32.gmra.mxu0 %v395
      %v512 = vpop.f32.mrf.mxu0
      %v513 = vadd.f32 %v429, %v512
      %v514 = vpop.f32.mrf.mxu0
      %515 = vmatprep.mubr.f32.mxu0 0.0
      %516 = vmatmul.mubr.f32.gmra.mxu0 %v396
      %v517 = vpop.f32.mrf.mxu0
      %v518 = vadd.f32 %v429, %v517
      %v519 = vpop.f32.mrf.mxu0
      %520 = vmatprep.mubr.f32.mxu0 0.0
      %521 = vmatmul.mubr.f32.gmra.mxu0 %v397
      %v522 = vpop.f32.mrf.mxu0
      %v523 = vadd.f32 %v429, %v522
      %v524 = vpop.f32.mrf.mxu0
      %525 = vmatprep.mubr.f32.mxu0 0.0
      %526 = vmatmul.mubr.f32.gmra.mxu0 %v398
      %v527 = vpop.f32.mrf.mxu0
      %v528 = vadd.f32 %v429, %v527
      %v529 = vpop.f32.mrf.mxu0
      %530 = vmatprep.mubr.f32.mxu0 0.0
      %531 = vmatmul.mubr.f32.gmra.mxu0 %v399
      %v532 = vpop.f32.mrf.mxu0
      %v533 = vadd.f32 %v429, %v532
      %v534 = vpop.f32.mrf.mxu0
      %535 = vmatprep.mubr.f32.mxu0 0.0
      %536 = vmatmul.mubr.f32.gmra.mxu0 %v400
      %v537 = vpop.f32.mrf.mxu0
      %v538 = vadd.f32 %v429, %v537
      %v539 = vpop.f32.mrf.mxu0
      %540 = vmatprep.mubr.f32.mxu0 0.0
      %541 = vmatmul.mubr.f32.gmra.mxu0 %v401
      %v542 = vpop.f32.mrf.mxu0
      %v543 = vadd.f32 %v429, %v542
      %v544 = vpop.f32.mrf.mxu0
      %545 = vmatprep.mubr.f32.mxu0 0.0
      %546 = vmatmul.mubr.f32.gmra.mxu0 %v402
      %v547 = vpop.f32.mrf.mxu0
      %v548 = vadd.f32 %v429, %v547
      %v549 = vpop.f32.mrf.mxu0
      %550 = vmatprep.mubr.f32.mxu0 0.0
      %551 = vmatmul.mubr.f32.gmra.mxu0 %v403
      %v552 = vpop.f32.mrf.mxu0
      %v553 = vadd.f32 %v429, %v552
      %v554 = vpop.f32.mrf.mxu0
      %555 = vmatprep.mubr.f32.mxu0 0.0
      %556 = vmatmul.mubr.f32.gmra.mxu0 %v404
      %v557 = vpop.f32.mrf.mxu0
      %v558 = vadd.f32 %v429, %v557
      %v559 = vpop.f32.mrf.mxu0
      %560 = vmatprep.mubr.f32.mxu0 0.0
      %561 = vmatmul.mubr.f32.gmra.mxu0 %v405
      %v562 = vpop.f32.mrf.mxu0
      %v563 = vadd.f32 %v429, %v562
      %v564 = vpop.f32.mrf.mxu0
      %565 = vmatprep.mubr.f32.mxu0 0.0
      %566 = vmatmul.mubr.f32.gmra.mxu0 %v406
      %v567 = vpop.f32.mrf.mxu0
      %v568 = vadd.f32 %v429, %v567
      %v569 = vpop.f32.mrf.mxu0
      %570 = vmatprep.mubr.f32.mxu0 0.0
      %571 = vmatmul.mubr.f32.gmra.mxu0 %v407
      %v572 = vpop.f32.mrf.mxu0
      %v573 = vadd.f32 %v429, %v572
      %v574 = vpop.f32.mrf.mxu0
      %575 = vdwg.mxu0
      %v576 = vld [vmem:[%s4] sm:$0x1]
      %v577 = vld [vmem:[%s5] sm:$0x1]
      %578 = vadd.xlane.f32.xlu0 %v498
      %v579 = vpop.xlane.xlu0 %578
      %580 = vadd.xlane.f32.xlu0 %v503
      %v581 = vpop.xlane.xlu0 %580
      %582 = vadd.xlane.f32.xlu0 %v508
      %v583 = vpop.xlane.xlu0 %582
      %584 = vadd.xlane.f32.xlu0 %v513
      %v585 = vpop.xlane.xlu0 %584
      %586 = vadd.xlane.f32.xlu0 %v518
      %v587 = vpop.xlane.xlu0 %586
      %588 = vadd.xlane.f32.xlu0 %v523
      %v589 = vpop.xlane.xlu0 %588
      %590 = vadd.xlane.f32.xlu0 %v528
      %v591 = vpop.xlane.xlu0 %590
      %592 = vadd.xlane.f32.xlu0 %v533
      %v593 = vpop.xlane.xlu0 %592
      %594 = vadd.xlane.f32.xlu0 %v538
      %v595 = vpop.xlane.xlu0 %594
      %596 = vadd.xlane.f32.xlu0 %v543
      %v597 = vpop.xlane.xlu0 %596
      %598 = vadd.xlane.f32.xlu0 %v548
      %v599 = vpop.xlane.xlu0 %598
      %600 = vadd.xlane.f32.xlu0 %v553
      %v601 = vpop.xlane.xlu0 %600
      %602 = vadd.xlane.f32.xlu0 %v558
      %v603 = vpop.xlane.xlu0 %602
      %604 = vadd.xlane.f32.xlu0 %v563
      %v605 = vpop.xlane.xlu0 %604
      %606 = vadd.xlane.f32.xlu0 %v568
      %v607 = vpop.xlane.xlu0 %606
      %608 = vadd.xlane.f32.xlu0 %v573
      %v609 = vpop.xlane.xlu0 %608
      %v610 = vmul.f32 %v579, 0.015625
      %v611 = vmul.f32 %v581, 0.015625
      %v612 = vmul.f32 %v583, 0.015625
      %v613 = vmul.f32 %v585, 0.015625
      %v614 = vmul.f32 %v587, 0.015625
      %v615 = vmul.f32 %v589, 0.015625
      %v616 = vmul.f32 %v591, 0.015625
      %v617 = vmul.f32 %v593, 0.015625
      %v618 = vmul.f32 %v595, 0.015625
      %v619 = vmul.f32 %v597, 0.015625
      %v620 = vmul.f32 %v599, 0.015625
      %v621 = vmul.f32 %v601, 0.015625
      %v622 = vmul.f32 %v603, 0.015625
      %v623 = vmul.f32 %v605, 0.015625
      %v624 = vmul.f32 %v607, 0.015625
      %v625 = vmul.f32 %v609, 0.015625
      %v626 = vlaneseq
      %v627 = vand.u32 %v626, 127
      %vm628 = vcmp.lt.s32.totalorder %v627, 64
      %v629 = vsub.f32 %v498, %v610
      %v630 = vsub.f32 %v503, %v611
      %v631 = vsub.f32 %v508, %v612
      %v632 = vsub.f32 %v513, %v613
      %v633 = vsub.f32 %v518, %v614
      %v634 = vsub.f32 %v523, %v615
      %v635 = vsub.f32 %v528, %v616
      %v636 = vsub.f32 %v533, %v617
      %v637 = vsub.f32 %v538, %v618
      %v638 = vsub.f32 %v543, %v619
      %v639 = vsub.f32 %v548, %v620
      %v640 = vsub.f32 %v553, %v621
      %v641 = vsub.f32 %v558, %v622
      %v642 = vsub.f32 %v563, %v623
      %v643 = vsub.f32 %v568, %v624
      %v644 = vsub.f32 %v573, %v625
      %v645 = vsel %vm628, %v629, 0.0
      %v646 = vsel %vm628, %v630, 0.0
      %v647 = vsel %vm628, %v631, 0.0
      %v648 = vsel %vm628, %v632, 0.0
      %v649 = vsel %vm628, %v633, 0.0
      %v650 = vsel %vm628, %v634, 0.0
      %v651 = vsel %vm628, %v635, 0.0
      %v652 = vsel %vm628, %v636, 0.0
      %v653 = vsel %vm628, %v637, 0.0
      %v654 = vsel %vm628, %v638, 0.0
      %v655 = vsel %vm628, %v639, 0.0
      %v656 = vsel %vm628, %v640, 0.0
      %v657 = vsel %vm628, %v641, 0.0
      %v658 = vsel %vm628, %v642, 0.0
      %v659 = vsel %vm628, %v643, 0.0
      %v660 = vsel %vm628, %v644, 0.0
      %v661 = vmul.f32 %v645, %v645
      %v662 = vmul.f32 %v646, %v646
      %v663 = vmul.f32 %v647, %v647
      %v664 = vmul.f32 %v648, %v648
      %v665 = vmul.f32 %v649, %v649
      %v666 = vmul.f32 %v650, %v650
      %v667 = vmul.f32 %v651, %v651
      %v668 = vmul.f32 %v652, %v652
      %v669 = vmul.f32 %v653, %v653
      %v670 = vmul.f32 %v654, %v654
      %v671 = vmul.f32 %v655, %v655
      %v672 = vmul.f32 %v656, %v656
      %v673 = vmul.f32 %v657, %v657
      %v674 = vmul.f32 %v658, %v658
      %v675 = vmul.f32 %v659, %v659
      %v676 = vmul.f32 %v660, %v660
      %677 = vadd.xlane.f32.xlu0 %v661
      %v678 = vpop.xlane.xlu0 %677
      %679 = vadd.xlane.f32.xlu0 %v662
      %v680 = vpop.xlane.xlu0 %679
      %681 = vadd.xlane.f32.xlu0 %v663
      %v682 = vpop.xlane.xlu0 %681
      %683 = vadd.xlane.f32.xlu0 %v664
      %v684 = vpop.xlane.xlu0 %683
      %685 = vadd.xlane.f32.xlu0 %v665
      %v686 = vpop.xlane.xlu0 %685
      %687 = vadd.xlane.f32.xlu0 %v666
      %v688 = vpop.xlane.xlu0 %687
      %689 = vadd.xlane.f32.xlu0 %v667
      %v690 = vpop.xlane.xlu0 %689
      %691 = vadd.xlane.f32.xlu0 %v668
      %v692 = vpop.xlane.xlu0 %691
      %693 = vadd.xlane.f32.xlu0 %v669
      %v694 = vpop.xlane.xlu0 %693
      %695 = vadd.xlane.f32.xlu0 %v670
      %v696 = vpop.xlane.xlu0 %695
      %697 = vadd.xlane.f32.xlu0 %v671
      %v698 = vpop.xlane.xlu0 %697
      %699 = vadd.xlane.f32.xlu0 %v672
      %v700 = vpop.xlane.xlu0 %699
      %701 = vadd.xlane.f32.xlu0 %v673
      %v702 = vpop.xlane.xlu0 %701
      %703 = vadd.xlane.f32.xlu0 %v674
      %v704 = vpop.xlane.xlu0 %703
      %705 = vadd.xlane.f32.xlu0 %v675
      %v706 = vpop.xlane.xlu0 %705
      %707 = vadd.xlane.f32.xlu0 %v676
      %v708 = vpop.xlane.xlu0 %707
      %v709 = vmul.f32 %v678, 0.015625
      %v710 = vmul.f32 %v680, 0.015625
      %v711 = vmul.f32 %v682, 0.015625
      %v712 = vmul.f32 %v684, 0.015625
      %v713 = vmul.f32 %v686, 0.015625
      %v714 = vmul.f32 %v688, 0.015625
      %v715 = vmul.f32 %v690, 0.015625
      %v716 = vmul.f32 %v692, 0.015625
      %v717 = vmul.f32 %v694, 0.015625
      %v718 = vmul.f32 %v696, 0.015625
      %v719 = vmul.f32 %v698, 0.015625
      %v720 = vmul.f32 %v700, 0.015625
      %v721 = vmul.f32 %v702, 0.015625
      %v722 = vmul.f32 %v704, 0.015625
      %v723 = vmul.f32 %v706, 0.015625
      %v724 = vmul.f32 %v708, 0.015625
      %v725 = vadd.f32 %v709, 1e-05
      %v726 = vadd.f32 %v710, 1e-05
      %v727 = vadd.f32 %v711, 1e-05
      %v728 = vadd.f32 %v712, 1e-05
      %v729 = vadd.f32 %v713, 1e-05
      %v730 = vadd.f32 %v714, 1e-05
      %v731 = vadd.f32 %v715, 1e-05
      %v732 = vadd.f32 %v716, 1e-05
      %v733 = vadd.f32 %v717, 1e-05
      %v734 = vadd.f32 %v718, 1e-05
      %v735 = vadd.f32 %v719, 1e-05
      %v736 = vadd.f32 %v720, 1e-05
      %v737 = vadd.f32 %v721, 1e-05
      %v738 = vadd.f32 %v722, 1e-05
      %v739 = vadd.f32 %v723, 1e-05
      %v740 = vadd.f32 %v724, 1e-05
      %v741 = vrsqrt.pop %v725
      %v742 = vrsqrt.pop %v726
      %v743 = vrsqrt.pop %v727
      %v744 = vrsqrt.pop %v728
      %v745 = vrsqrt.pop %v729
      %v746 = vrsqrt.pop %v730
      %v747 = vrsqrt.pop %v731
      %v748 = vrsqrt.pop %v732
      %v749 = vrsqrt.pop %v733
      %v750 = vrsqrt.pop %v734
      %v751 = vrsqrt.pop %v735
      %v752 = vrsqrt.pop %v736
      %v753 = vrsqrt.pop %v737
      %v754 = vrsqrt.pop %v738
      %v755 = vrsqrt.pop %v739
      %v756 = vrsqrt.pop %v740
      %v757 = vmul.f32 %v645, %v741
      %v758 = vmul.f32 %v646, %v742
      %v759 = vmul.f32 %v647, %v743
      %v760 = vmul.f32 %v648, %v744
      %v761 = vmul.f32 %v649, %v745
      %v762 = vmul.f32 %v650, %v746
      %v763 = vmul.f32 %v651, %v747
      %v764 = vmul.f32 %v652, %v748
      %v765 = vmul.f32 %v653, %v749
      %v766 = vmul.f32 %v654, %v750
      %v767 = vmul.f32 %v655, %v751
      %v768 = vmul.f32 %v656, %v752
      %v769 = vmul.f32 %v657, %v753
      %v770 = vmul.f32 %v658, %v754
      %v771 = vmul.f32 %v659, %v755
      %v772 = vmul.f32 %v660, %v756
      %v774 = vlaneseq
      %v775 = vshrl.u32 %v774, 7
      %v776 = vsub.s32 0, %v775
      %v777 = vrot.slane %v576, %v776
      %v779 = vmul.f32 %v757, %v777
      %v780 = vmul.f32 %v758, %v777
      %v781 = vmul.f32 %v759, %v777
      %v782 = vmul.f32 %v760, %v777
      %v783 = vmul.f32 %v761, %v777
      %v784 = vmul.f32 %v762, %v777
      %v785 = vmul.f32 %v763, %v777
      %v786 = vmul.f32 %v764, %v777
      %v787 = vmul.f32 %v765, %v777
      %v788 = vmul.f32 %v766, %v777
      %v789 = vmul.f32 %v767, %v777
      %v790 = vmul.f32 %v768, %v777
      %v791 = vmul.f32 %v769, %v777
      %v792 = vmul.f32 %v770, %v777
      %v793 = vmul.f32 %v771, %v777
      %v794 = vmul.f32 %v772, %v777
      %v796 = vlaneseq
      %v797 = vshrl.u32 %v796, 7
      %v798 = vsub.s32 0, %v797
      %v799 = vrot.slane %v577, %v798
      %v801 = vadd.f32 %v779, %v799
      %v802 = vadd.f32 %v780, %v799
      %v803 = vadd.f32 %v781, %v799
      %v804 = vadd.f32 %v782, %v799
      %v805 = vadd.f32 %v783, %v799
      %v806 = vadd.f32 %v784, %v799
      %v807 = vadd.f32 %v785, %v799
      %v808 = vadd.f32 %v786, %v799
      %v809 = vadd.f32 %v787, %v799
      %v810 = vadd.f32 %v788, %v799
      %v811 = vadd.f32 %v789, %v799
      %v812 = vadd.f32 %v790, %v799
      %v813 = vadd.f32 %v791, %v799
      %v814 = vadd.f32 %v792, %v799
      %v815 = vadd.f32 %v793, %v799
      %v816 = vadd.f32 %v794, %v799
      %v817 = vmax.f32 %v801, 0.0
      %v818 = vmax.f32 %v802, 0.0
      %v819 = vmax.f32 %v803, 0.0
      %v820 = vmax.f32 %v804, 0.0
      %v821 = vmax.f32 %v805, 0.0
      %v822 = vmax.f32 %v806, 0.0
      %v823 = vmax.f32 %v807, 0.0
      %v824 = vmax.f32 %v808, 0.0
      %v825 = vmax.f32 %v809, 0.0
      %v826 = vmax.f32 %v810, 0.0
      %v827 = vmax.f32 %v811, 0.0
      %v828 = vmax.f32 %v812, 0.0
      %v829 = vmax.f32 %v813, 0.0
      %v830 = vmax.f32 %v814, 0.0
      %v831 = vmax.f32 %v815, 0.0
      %v832 = vmax.f32 %v816, 0.0
      %v833 = vld [vmem:[%s6] sm:$0xff]
      %v834 = vld [vmem:[%s6 + $0x8] sm:$0xff]
      %v835 = vld [vmem:[%s6 + $0x10] sm:$0xff]
      %v836 = vld [vmem:[%s6 + $0x18] sm:$0xff]
      %v837 = vld [vmem:[%s6 + $0x20] sm:$0xff]
      %v838 = vld [vmem:[%s6 + $0x28] sm:$0xff]
      %v839 = vld [vmem:[%s6 + $0x30] sm:$0xff]
      %v840 = vld [vmem:[%s6 + $0x38] sm:$0xff]
      %v841 = vld [vmem:[%s6 + $0x40] sm:$0xff]
      %v842 = vld [vmem:[%s6 + $0x48] sm:$0xff]
      %v843 = vld [vmem:[%s6 + $0x50] sm:$0xff]
      %v844 = vld [vmem:[%s6 + $0x58] sm:$0xff]
      %v845 = vld [vmem:[%s6 + $0x60] sm:$0xff]
      %v846 = vld [vmem:[%s6 + $0x68] sm:$0xff]
      %v847 = vld [vmem:[%s6 + $0x70] sm:$0xff]
      %v848 = vld [vmem:[%s6 + $0x78] sm:$0xff]
      %v849 = vld [vmem:[%s7] sm:$0x1]
      %v851 = vlaneseq
      %v852 = vshrl.u32 %v851, 7
      %v853 = vsub.s32 0, %v852
      %v854 = vrot.slane %v849, %v853
      %856 = vmatprep.subr.mxu0 0.0
      %857 = vmatpush1.msra.mxu0 %v848
      %858 = vmatprep.subr.mxu0 0.0
      %859 = vmatpush1.msra.mxu0 %v847
      %860 = vmatprep.subr.mxu0 0.0
      %861 = vmatpush1.msra.mxu0 %v846
      %862 = vmatprep.subr.mxu0 0.0
      %863 = vmatpush1.msra.mxu0 %v845
      %864 = vmatprep.subr.mxu0 0.0
      %865 = vmatpush1.msra.mxu0 %v844
      %866 = vmatprep.subr.mxu0 0.0
      %867 = vmatpush1.msra.mxu0 %v843
      %868 = vmatprep.subr.mxu0 0.0
      %869 = vmatpush1.msra.mxu0 %v842
      %870 = vmatprep.subr.mxu0 0.0
      %871 = vmatpush1.msra.mxu0 %v841
      %872 = vmatprep.subr.mxu0 0.0
      %873 = vmatpush1.msra.mxu0 %v840
      %874 = vmatprep.subr.mxu0 0.0
      %875 = vmatpush1.msra.mxu0 %v839
      %876 = vmatprep.subr.mxu0 0.0
      %877 = vmatpush1.msra.mxu0 %v838
      %878 = vmatprep.subr.mxu0 0.0
      %879 = vmatpush1.msra.mxu0 %v837
      %880 = vmatprep.subr.mxu0 0.0
      %881 = vmatpush1.msra.mxu0 %v836
      %882 = vmatprep.subr.mxu0 0.0
      %883 = vmatpush1.msra.mxu0 %v835
      %884 = vmatprep.subr.mxu0 0.0
      %885 = vmatpush1.msra.mxu0 %v834
      %886 = vmatprep.subr.mxu0 0.0
      %887 = vmatpush1.msra.mxu0 %v833
      %888 = vmatprep.subr.mxu0 0.0
      %889 = vmatpush2.msra.mxu0 0.0
      %890 = vmatprep.subr.mxu0 0.0
      %891 = vmatpush2.msra.mxu0 0.0
      %892 = vmatprep.subr.mxu0 0.0
      %893 = vmatpush2.msra.mxu0 0.0
      %894 = vmatprep.subr.mxu0 0.0
      %895 = vmatpush2.msra.mxu0 0.0
      %896 = vmatprep.subr.mxu0 0.0
      %897 = vmatpush2.msra.mxu0 0.0
      %898 = vmatprep.subr.mxu0 0.0
      %899 = vmatpush2.msra.mxu0 0.0
      %900 = vmatprep.subr.mxu0 0.0
      %901 = vmatpush2.msra.mxu0 0.0
      %902 = vmatprep.subr.mxu0 0.0
      %903 = vmatpush2.msra.mxu0 0.0
      %904 = vmatprep.subr.mxu0 0.0
      %905 = vmatpush2.msra.mxu0 0.0
      %906 = vmatprep.subr.mxu0 0.0
      %907 = vmatpush2.msra.mxu0 0.0
      %908 = vmatprep.subr.mxu0 0.0
      %909 = vmatpush2.msra.mxu0 0.0
      %910 = vmatprep.subr.mxu0 0.0
      %911 = vmatpush2.msra.mxu0 0.0
      %912 = vmatprep.subr.mxu0 0.0
      %913 = vmatpush2.msra.mxu0 0.0
      %914 = vmatprep.subr.mxu0 0.0
      %915 = vmatpush2.msra.mxu0 0.0
      %916 = vmatprep.subr.mxu0 0.0
      %917 = vmatpush2.msra.mxu0 0.0
      %918 = vmatprep.subr.mxu0 0.0
      %919 = vmatpush2.msra.mxu0 0.0
      %920 = vmatprep.mubr.f32.mxu0 0.0
      %921 = vmatmul.mubr.f32.gmra.mxu0 %v817
      %v922 = vpop.f32.mrf.mxu0
      %v923 = vadd.f32 %v854, %v922
      %v924 = vpop.f32.mrf.mxu0
      %925 = vmatprep.mubr.f32.mxu0 0.0
      %926 = vmatmul.mubr.f32.gmra.mxu0 %v818
      %v927 = vpop.f32.mrf.mxu0
      %v928 = vadd.f32 %v854, %v927
      %v929 = vpop.f32.mrf.mxu0
      %930 = vmatprep.mubr.f32.mxu0 0.0
      %931 = vmatmul.mubr.f32.gmra.mxu0 %v819
      %v932 = vpop.f32.mrf.mxu0
      %v933 = vadd.f32 %v854, %v932
      %v934 = vpop.f32.mrf.mxu0
      %935 = vmatprep.mubr.f32.mxu0 0.0
      %936 = vmatmul.mubr.f32.gmra.mxu0 %v820
      %v937 = vpop.f32.mrf.mxu0
      %v938 = vadd.f32 %v854, %v937
      %v939 = vpop.f32.mrf.mxu0
      %940 = vmatprep.mubr.f32.mxu0 0.0
      %941 = vmatmul.mubr.f32.gmra.mxu0 %v821
      %v942 = vpop.f32.mrf.mxu0
      %v943 = vadd.f32 %v854, %v942
      %v944 = vpop.f32.mrf.mxu0
      %945 = vmatprep.mubr.f32.mxu0 0.0
      %946 = vmatmul.mubr.f32.gmra.mxu0 %v822
      %v947 = vpop.f32.mrf.mxu0
      %v948 = vadd.f32 %v854, %v947
      %v949 = vpop.f32.mrf.mxu0
      %950 = vmatprep.mubr.f32.mxu0 0.0
      %951 = vmatmul.mubr.f32.gmra.mxu0 %v823
      %v952 = vpop.f32.mrf.mxu0
      %v953 = vadd.f32 %v854, %v952
      %v954 = vpop.f32.mrf.mxu0
      %955 = vmatprep.mubr.f32.mxu0 0.0
      %956 = vmatmul.mubr.f32.gmra.mxu0 %v824
      %v957 = vpop.f32.mrf.mxu0
      %v958 = vadd.f32 %v854, %v957
      %v959 = vpop.f32.mrf.mxu0
      %960 = vmatprep.mubr.f32.mxu0 0.0
      %961 = vmatmul.mubr.f32.gmra.mxu0 %v825
      %v962 = vpop.f32.mrf.mxu0
      %v963 = vadd.f32 %v854, %v962
      %v964 = vpop.f32.mrf.mxu0
      %965 = vmatprep.mubr.f32.mxu0 0.0
      %966 = vmatmul.mubr.f32.gmra.mxu0 %v826
      %v967 = vpop.f32.mrf.mxu0
      %v968 = vadd.f32 %v854, %v967
      %v969 = vpop.f32.mrf.mxu0
      %970 = vmatprep.mubr.f32.mxu0 0.0
      %971 = vmatmul.mubr.f32.gmra.mxu0 %v827
      %v972 = vpop.f32.mrf.mxu0
      %v973 = vadd.f32 %v854, %v972
      %v974 = vpop.f32.mrf.mxu0
      %975 = vmatprep.mubr.f32.mxu0 0.0
      %976 = vmatmul.mubr.f32.gmra.mxu0 %v828
      %v977 = vpop.f32.mrf.mxu0
      %v978 = vadd.f32 %v854, %v977
      %v979 = vpop.f32.mrf.mxu0
      %980 = vmatprep.mubr.f32.mxu0 0.0
      %981 = vmatmul.mubr.f32.gmra.mxu0 %v829
      %v982 = vpop.f32.mrf.mxu0
      %v983 = vadd.f32 %v854, %v982
      %v984 = vpop.f32.mrf.mxu0
      %985 = vmatprep.mubr.f32.mxu0 0.0
      %986 = vmatmul.mubr.f32.gmra.mxu0 %v830
      %v987 = vpop.f32.mrf.mxu0
      %v988 = vadd.f32 %v854, %v987
      %v989 = vpop.f32.mrf.mxu0
      %990 = vmatprep.mubr.f32.mxu0 0.0
      %991 = vmatmul.mubr.f32.gmra.mxu0 %v831
      %v992 = vpop.f32.mrf.mxu0
      %v993 = vadd.f32 %v854, %v992
      %v994 = vpop.f32.mrf.mxu0
      %995 = vmatprep.mubr.f32.mxu0 0.0
      %996 = vmatmul.mubr.f32.gmra.mxu0 %v832
      %v997 = vpop.f32.mrf.mxu0
      %v998 = vadd.f32 %v854, %v997
      %v999 = vpop.f32.mrf.mxu0
      %1000 = vdwg.mxu0
      %v1001 = vld [vmem:[%s8] sm:$0x1]
      %v1002 = vld [vmem:[%s9] sm:$0x1]
      %1003 = vadd.xlane.f32.xlu0 %v923
      %v1004 = vpop.xlane.xlu0 %1003
      %1005 = vadd.xlane.f32.xlu0 %v928
      %v1006 = vpop.xlane.xlu0 %1005
      %1007 = vadd.xlane.f32.xlu0 %v933
      %v1008 = vpop.xlane.xlu0 %1007
      %1009 = vadd.xlane.f32.xlu0 %v938
      %v1010 = vpop.xlane.xlu0 %1009
      %1011 = vadd.xlane.f32.xlu0 %v943
      %v1012 = vpop.xlane.xlu0 %1011
      %1013 = vadd.xlane.f32.xlu0 %v948
      %v1014 = vpop.xlane.xlu0 %1013
      %1015 = vadd.xlane.f32.xlu0 %v953
      %v1016 = vpop.xlane.xlu0 %1015
      %1017 = vadd.xlane.f32.xlu0 %v958
      %v1018 = vpop.xlane.xlu0 %1017
      %1019 = vadd.xlane.f32.xlu0 %v963
      %v1020 = vpop.xlane.xlu0 %1019
      %1021 = vadd.xlane.f32.xlu0 %v968
      %v1022 = vpop.xlane.xlu0 %1021
      %1023 = vadd.xlane.f32.xlu0 %v973
      %v1024 = vpop.xlane.xlu0 %1023
      %1025 = vadd.xlane.f32.xlu0 %v978
      %v1026 = vpop.xlane.xlu0 %1025
      %1027 = vadd.xlane.f32.xlu0 %v983
      %v1028 = vpop.xlane.xlu0 %1027
      %1029 = vadd.xlane.f32.xlu0 %v988
      %v1030 = vpop.xlane.xlu0 %1029
      %1031 = vadd.xlane.f32.xlu0 %v993
      %v1032 = vpop.xlane.xlu0 %1031
      %1033 = vadd.xlane.f32.xlu0 %v998
      %v1034 = vpop.xlane.xlu0 %1033
      %v1035 = vmul.f32 %v1004, 0.015625
      %v1036 = vmul.f32 %v1006, 0.015625
      %v1037 = vmul.f32 %v1008, 0.015625
      %v1038 = vmul.f32 %v1010, 0.015625
      %v1039 = vmul.f32 %v1012, 0.015625
      %v1040 = vmul.f32 %v1014, 0.015625
      %v1041 = vmul.f32 %v1016, 0.015625
      %v1042 = vmul.f32 %v1018, 0.015625
      %v1043 = vmul.f32 %v1020, 0.015625
      %v1044 = vmul.f32 %v1022, 0.015625
      %v1045 = vmul.f32 %v1024, 0.015625
      %v1046 = vmul.f32 %v1026, 0.015625
      %v1047 = vmul.f32 %v1028, 0.015625
      %v1048 = vmul.f32 %v1030, 0.015625
      %v1049 = vmul.f32 %v1032, 0.015625
      %v1050 = vmul.f32 %v1034, 0.015625
      %v1051 = vsub.f32 %v923, %v1035
      %v1052 = vsub.f32 %v928, %v1036
      %v1053 = vsub.f32 %v933, %v1037
      %v1054 = vsub.f32 %v938, %v1038
      %v1055 = vsub.f32 %v943, %v1039
      %v1056 = vsub.f32 %v948, %v1040
      %v1057 = vsub.f32 %v953, %v1041
      %v1058 = vsub.f32 %v958, %v1042
      %v1059 = vsub.f32 %v963, %v1043
      %v1060 = vsub.f32 %v968, %v1044
      %v1061 = vsub.f32 %v973, %v1045
      %v1062 = vsub.f32 %v978, %v1046
      %v1063 = vsub.f32 %v983, %v1047
      %v1064 = vsub.f32 %v988, %v1048
      %v1065 = vsub.f32 %v993, %v1049
      %v1066 = vsub.f32 %v998, %v1050
      %v1067 = vsel %vm628, %v1051, 0.0
      %v1068 = vsel %vm628, %v1052, 0.0
      %v1069 = vsel %vm628, %v1053, 0.0
      %v1070 = vsel %vm628, %v1054, 0.0
      %v1071 = vsel %vm628, %v1055, 0.0
      %v1072 = vsel %vm628, %v1056, 0.0
      %v1073 = vsel %vm628, %v1057, 0.0
      %v1074 = vsel %vm628, %v1058, 0.0
      %v1075 = vsel %vm628, %v1059, 0.0
      %v1076 = vsel %vm628, %v1060, 0.0
      %v1077 = vsel %vm628, %v1061, 0.0
      %v1078 = vsel %vm628, %v1062, 0.0
      %v1079 = vsel %vm628, %v1063, 0.0
      %v1080 = vsel %vm628, %v1064, 0.0
      %v1081 = vsel %vm628, %v1065, 0.0
      %v1082 = vsel %vm628, %v1066, 0.0
      %v1083 = vmul.f32 %v1067, %v1067
      %v1084 = vmul.f32 %v1068, %v1068
      %v1085 = vmul.f32 %v1069, %v1069
      %v1086 = vmul.f32 %v1070, %v1070
      %v1087 = vmul.f32 %v1071, %v1071
      %v1088 = vmul.f32 %v1072, %v1072
      %v1089 = vmul.f32 %v1073, %v1073
      %v1090 = vmul.f32 %v1074, %v1074
      %v1091 = vmul.f32 %v1075, %v1075
      %v1092 = vmul.f32 %v1076, %v1076
      %v1093 = vmul.f32 %v1077, %v1077
      %v1094 = vmul.f32 %v1078, %v1078
      %v1095 = vmul.f32 %v1079, %v1079
      %v1096 = vmul.f32 %v1080, %v1080
      %v1097 = vmul.f32 %v1081, %v1081
      %v1098 = vmul.f32 %v1082, %v1082
      %1099 = vadd.xlane.f32.xlu0 %v1083
      %v1100 = vpop.xlane.xlu0 %1099
      %1101 = vadd.xlane.f32.xlu0 %v1084
      %v1102 = vpop.xlane.xlu0 %1101
      %1103 = vadd.xlane.f32.xlu0 %v1085
      %v1104 = vpop.xlane.xlu0 %1103
      %1105 = vadd.xlane.f32.xlu0 %v1086
      %v1106 = vpop.xlane.xlu0 %1105
      %1107 = vadd.xlane.f32.xlu0 %v1087
      %v1108 = vpop.xlane.xlu0 %1107
      %1109 = vadd.xlane.f32.xlu0 %v1088
      %v1110 = vpop.xlane.xlu0 %1109
      %1111 = vadd.xlane.f32.xlu0 %v1089
      %v1112 = vpop.xlane.xlu0 %1111
      %1113 = vadd.xlane.f32.xlu0 %v1090
      %v1114 = vpop.xlane.xlu0 %1113
      %1115 = vadd.xlane.f32.xlu0 %v1091
      %v1116 = vpop.xlane.xlu0 %1115
      %1117 = vadd.xlane.f32.xlu0 %v1092
      %v1118 = vpop.xlane.xlu0 %1117
      %1119 = vadd.xlane.f32.xlu0 %v1093
      %v1120 = vpop.xlane.xlu0 %1119
      %1121 = vadd.xlane.f32.xlu0 %v1094
      %v1122 = vpop.xlane.xlu0 %1121
      %1123 = vadd.xlane.f32.xlu0 %v1095
      %v1124 = vpop.xlane.xlu0 %1123
      %1125 = vadd.xlane.f32.xlu0 %v1096
      %v1126 = vpop.xlane.xlu0 %1125
      %1127 = vadd.xlane.f32.xlu0 %v1097
      %v1128 = vpop.xlane.xlu0 %1127
      %1129 = vadd.xlane.f32.xlu0 %v1098
      %v1130 = vpop.xlane.xlu0 %1129
      %v1131 = vmul.f32 %v1100, 0.015625
      %v1132 = vmul.f32 %v1102, 0.015625
      %v1133 = vmul.f32 %v1104, 0.015625
      %v1134 = vmul.f32 %v1106, 0.015625
      %v1135 = vmul.f32 %v1108, 0.015625
      %v1136 = vmul.f32 %v1110, 0.015625
      %v1137 = vmul.f32 %v1112, 0.015625
      %v1138 = vmul.f32 %v1114, 0.015625
      %v1139 = vmul.f32 %v1116, 0.015625
      %v1140 = vmul.f32 %v1118, 0.015625
      %v1141 = vmul.f32 %v1120, 0.015625
      %v1142 = vmul.f32 %v1122, 0.015625
      %v1143 = vmul.f32 %v1124, 0.015625
      %v1144 = vmul.f32 %v1126, 0.015625
      %v1145 = vmul.f32 %v1128, 0.015625
      %v1146 = vmul.f32 %v1130, 0.015625
      %v1147 = vadd.f32 %v1131, 1e-05
      %v1148 = vadd.f32 %v1132, 1e-05
      %v1149 = vadd.f32 %v1133, 1e-05
      %v1150 = vadd.f32 %v1134, 1e-05
      %v1151 = vadd.f32 %v1135, 1e-05
      %v1152 = vadd.f32 %v1136, 1e-05
      %v1153 = vadd.f32 %v1137, 1e-05
      %v1154 = vadd.f32 %v1138, 1e-05
      %v1155 = vadd.f32 %v1139, 1e-05
      %v1156 = vadd.f32 %v1140, 1e-05
      %v1157 = vadd.f32 %v1141, 1e-05
      %v1158 = vadd.f32 %v1142, 1e-05
      %v1159 = vadd.f32 %v1143, 1e-05
      %v1160 = vadd.f32 %v1144, 1e-05
      %v1161 = vadd.f32 %v1145, 1e-05
      %v1162 = vadd.f32 %v1146, 1e-05
      %v1163 = vrsqrt.pop %v1147
      %v1164 = vrsqrt.pop %v1148
      %v1165 = vrsqrt.pop %v1149
      %v1166 = vrsqrt.pop %v1150
      %v1167 = vrsqrt.pop %v1151
      %v1168 = vrsqrt.pop %v1152
      %v1169 = vrsqrt.pop %v1153
      %v1170 = vrsqrt.pop %v1154
      %v1171 = vrsqrt.pop %v1155
      %v1172 = vrsqrt.pop %v1156
      %v1173 = vrsqrt.pop %v1157
      %v1174 = vrsqrt.pop %v1158
      %v1175 = vrsqrt.pop %v1159
      %v1176 = vrsqrt.pop %v1160
      %v1177 = vrsqrt.pop %v1161
      %v1178 = vrsqrt.pop %v1162
      %v1179 = vmul.f32 %v1067, %v1163
      %v1180 = vmul.f32 %v1068, %v1164
      %v1181 = vmul.f32 %v1069, %v1165
      %v1182 = vmul.f32 %v1070, %v1166
      %v1183 = vmul.f32 %v1071, %v1167
      %v1184 = vmul.f32 %v1072, %v1168
      %v1185 = vmul.f32 %v1073, %v1169
      %v1186 = vmul.f32 %v1074, %v1170
      %v1187 = vmul.f32 %v1075, %v1171
      %v1188 = vmul.f32 %v1076, %v1172
      %v1189 = vmul.f32 %v1077, %v1173
      %v1190 = vmul.f32 %v1078, %v1174
      %v1191 = vmul.f32 %v1079, %v1175
      %v1192 = vmul.f32 %v1080, %v1176
      %v1193 = vmul.f32 %v1081, %v1177
      %v1194 = vmul.f32 %v1082, %v1178
      %v1196 = vlaneseq
      %v1197 = vshrl.u32 %v1196, 7
      %v1198 = vsub.s32 0, %v1197
      %v1199 = vrot.slane %v1001, %v1198
      %v1201 = vmul.f32 %v1179, %v1199
      %v1202 = vmul.f32 %v1180, %v1199
      %v1203 = vmul.f32 %v1181, %v1199
      %v1204 = vmul.f32 %v1182, %v1199
      %v1205 = vmul.f32 %v1183, %v1199
      %v1206 = vmul.f32 %v1184, %v1199
      %v1207 = vmul.f32 %v1185, %v1199
      %v1208 = vmul.f32 %v1186, %v1199
      %v1209 = vmul.f32 %v1187, %v1199
      %v1210 = vmul.f32 %v1188, %v1199
      %v1211 = vmul.f32 %v1189, %v1199
      %v1212 = vmul.f32 %v1190, %v1199
      %v1213 = vmul.f32 %v1191, %v1199
      %v1214 = vmul.f32 %v1192, %v1199
      %v1215 = vmul.f32 %v1193, %v1199
      %v1216 = vmul.f32 %v1194, %v1199
      %v1218 = vlaneseq
      %v1219 = vshrl.u32 %v1218, 7
      %v1220 = vsub.s32 0, %v1219
      %v1221 = vrot.slane %v1002, %v1220
      %v1223 = vadd.f32 %v1201, %v1221
      %v1224 = vadd.f32 %v1202, %v1221
      %v1225 = vadd.f32 %v1203, %v1221
      %v1226 = vadd.f32 %v1204, %v1221
      %v1227 = vadd.f32 %v1205, %v1221
      %v1228 = vadd.f32 %v1206, %v1221
      %v1229 = vadd.f32 %v1207, %v1221
      %v1230 = vadd.f32 %v1208, %v1221
      %v1231 = vadd.f32 %v1209, %v1221
      %v1232 = vadd.f32 %v1210, %v1221
      %v1233 = vadd.f32 %v1211, %v1221
      %v1234 = vadd.f32 %v1212, %v1221
      %v1235 = vadd.f32 %v1213, %v1221
      %v1236 = vadd.f32 %v1214, %v1221
      %v1237 = vadd.f32 %v1215, %v1221
      %v1238 = vadd.f32 %v1216, %v1221
      %v1239 = vmax.f32 %v1223, 0.0
      %v1240 = vmax.f32 %v1224, 0.0
      %v1241 = vmax.f32 %v1225, 0.0
      %v1242 = vmax.f32 %v1226, 0.0
      %v1243 = vmax.f32 %v1227, 0.0
      %v1244 = vmax.f32 %v1228, 0.0
      %v1245 = vmax.f32 %v1229, 0.0
      %v1246 = vmax.f32 %v1230, 0.0
      %v1247 = vmax.f32 %v1231, 0.0
      %v1248 = vmax.f32 %v1232, 0.0
      %v1249 = vmax.f32 %v1233, 0.0
      %v1250 = vmax.f32 %v1234, 0.0
      %v1251 = vmax.f32 %v1235, 0.0
      %v1252 = vmax.f32 %v1236, 0.0
      %v1253 = vmax.f32 %v1237, 0.0
      %v1254 = vmax.f32 %v1238, 0.0
      %v1255 = vld [vmem:[%s10] sm:$0xff]
      %v1256 = vld [vmem:[%s10 + $0x8] sm:$0xff]
      %v1257 = vld [vmem:[%s10 + $0x10] sm:$0xff]
      %v1258 = vld [vmem:[%s10 + $0x18] sm:$0xff]
      %v1259 = vld [vmem:[%s10 + $0x20] sm:$0xff]
      %v1260 = vld [vmem:[%s10 + $0x28] sm:$0xff]
      %v1261 = vld [vmem:[%s10 + $0x30] sm:$0xff]
      %v1262 = vld [vmem:[%s10 + $0x38] sm:$0xff]
      %v1263 = vld [vmem:[%s10 + $0x40] sm:$0xff]
      %v1264 = vld [vmem:[%s10 + $0x48] sm:$0xff]
      %v1265 = vld [vmem:[%s10 + $0x50] sm:$0xff]
      %v1266 = vld [vmem:[%s10 + $0x58] sm:$0xff]
      %v1267 = vld [vmem:[%s10 + $0x60] sm:$0xff]
      %v1268 = vld [vmem:[%s10 + $0x68] sm:$0xff]
      %v1269 = vld [vmem:[%s10 + $0x70] sm:$0xff]
      %v1270 = vld [vmem:[%s10 + $0x78] sm:$0xff]
      %v1271 = vld [vmem:[%s11] sm:$0x1]
      %v1273 = vlaneseq
      %v1274 = vshrl.u32 %v1273, 7
      %v1275 = vsub.s32 0, %v1274
      %v1276 = vrot.slane %v1271, %v1275
      %1278 = vmatprep.subr.mxu0 0.0
      %1279 = vmatpush1.msra.mxu0 %v1270
      %1280 = vmatprep.subr.mxu0 0.0
      %1281 = vmatpush1.msra.mxu0 %v1269
      %1282 = vmatprep.subr.mxu0 0.0
      %1283 = vmatpush1.msra.mxu0 %v1268
      %1284 = vmatprep.subr.mxu0 0.0
      %1285 = vmatpush1.msra.mxu0 %v1267
      %1286 = vmatprep.subr.mxu0 0.0
      %1287 = vmatpush1.msra.mxu0 %v1266
      %1288 = vmatprep.subr.mxu0 0.0
      %1289 = vmatpush1.msra.mxu0 %v1265
      %1290 = vmatprep.subr.mxu0 0.0
      %1291 = vmatpush1.msra.mxu0 %v1264
      %1292 = vmatprep.subr.mxu0 0.0
      %1293 = vmatpush1.msra.mxu0 %v1263
      %1294 = vmatprep.subr.mxu0 0.0
      %1295 = vmatpush1.msra.mxu0 %v1262
      %1296 = vmatprep.subr.mxu0 0.0
      %1297 = vmatpush1.msra.mxu0 %v1261
      %1298 = vmatprep.subr.mxu0 0.0
      %1299 = vmatpush1.msra.mxu0 %v1260
      %1300 = vmatprep.subr.mxu0 0.0
      %1301 = vmatpush1.msra.mxu0 %v1259
      %1302 = vmatprep.subr.mxu0 0.0
      %1303 = vmatpush1.msra.mxu0 %v1258
      %1304 = vmatprep.subr.mxu0 0.0
      %1305 = vmatpush1.msra.mxu0 %v1257
      %1306 = vmatprep.subr.mxu0 0.0
      %1307 = vmatpush1.msra.mxu0 %v1256
      %1308 = vmatprep.subr.mxu0 0.0
      %1309 = vmatpush1.msra.mxu0 %v1255
      %1310 = vmatprep.subr.mxu0 0.0
      %1311 = vmatpush2.msra.mxu0 0.0
      %1312 = vmatprep.subr.mxu0 0.0
      %1313 = vmatpush2.msra.mxu0 0.0
      %1314 = vmatprep.subr.mxu0 0.0
      %1315 = vmatpush2.msra.mxu0 0.0
      %1316 = vmatprep.subr.mxu0 0.0
      %1317 = vmatpush2.msra.mxu0 0.0
      %1318 = vmatprep.subr.mxu0 0.0
      %1319 = vmatpush2.msra.mxu0 0.0
      %1320 = vmatprep.subr.mxu0 0.0
      %1321 = vmatpush2.msra.mxu0 0.0
      %1322 = vmatprep.subr.mxu0 0.0
      %1323 = vmatpush2.msra.mxu0 0.0
      %1324 = vmatprep.subr.mxu0 0.0
      %1325 = vmatpush2.msra.mxu0 0.0
      %1326 = vmatprep.subr.mxu0 0.0
      %1327 = vmatpush2.msra.mxu0 0.0
      %1328 = vmatprep.subr.mxu0 0.0
      %1329 = vmatpush2.msra.mxu0 0.0
      %1330 = vmatprep.subr.mxu0 0.0
      %1331 = vmatpush2.msra.mxu0 0.0
      %1332 = vmatprep.subr.mxu0 0.0
      %1333 = vmatpush2.msra.mxu0 0.0
      %1334 = vmatprep.subr.mxu0 0.0
      %1335 = vmatpush2.msra.mxu0 0.0
      %1336 = vmatprep.subr.mxu0 0.0
      %1337 = vmatpush2.msra.mxu0 0.0
      %1338 = vmatprep.subr.mxu0 0.0
      %1339 = vmatpush2.msra.mxu0 0.0
      %1340 = vmatprep.subr.mxu0 0.0
      %1341 = vmatpush2.msra.mxu0 0.0
      %1342 = vmatprep.mubr.f32.mxu0 0.0
      %1343 = vmatmul.mubr.f32.gmra.mxu0 %v1239
      %v1344 = vpop.f32.mrf.mxu0
      %v1345 = vadd.f32 %v1276, %v1344
      %v1346 = vpop.f32.mrf.mxu0
      %1347 = vmatprep.mubr.f32.mxu0 0.0
      %1348 = vmatmul.mubr.f32.gmra.mxu0 %v1240
      %v1349 = vpop.f32.mrf.mxu0
      %v1350 = vadd.f32 %v1276, %v1349
      %v1351 = vpop.f32.mrf.mxu0
      %1352 = vmatprep.mubr.f32.mxu0 0.0
      %1353 = vmatmul.mubr.f32.gmra.mxu0 %v1241
      %v1354 = vpop.f32.mrf.mxu0
      %v1355 = vadd.f32 %v1276, %v1354
      %v1356 = vpop.f32.mrf.mxu0
      %1357 = vmatprep.mubr.f32.mxu0 0.0
      %1358 = vmatmul.mubr.f32.gmra.mxu0 %v1242
      %v1359 = vpop.f32.mrf.mxu0
      %v1360 = vadd.f32 %v1276, %v1359
      %v1361 = vpop.f32.mrf.mxu0
      %1362 = vmatprep.mubr.f32.mxu0 0.0
      %1363 = vmatmul.mubr.f32.gmra.mxu0 %v1243
      %v1364 = vpop.f32.mrf.mxu0
      %v1365 = vadd.f32 %v1276, %v1364
      %v1366 = vpop.f32.mrf.mxu0
      %1367 = vmatprep.mubr.f32.mxu0 0.0
      %1368 = vmatmul.mubr.f32.gmra.mxu0 %v1244
      %v1369 = vpop.f32.mrf.mxu0
      %v1370 = vadd.f32 %v1276, %v1369
      %v1371 = vpop.f32.mrf.mxu0
      %1372 = vmatprep.mubr.f32.mxu0 0.0
      %1373 = vmatmul.mubr.f32.gmra.mxu0 %v1245
      %v1374 = vpop.f32.mrf.mxu0
      %v1375 = vadd.f32 %v1276, %v1374
      %v1376 = vpop.f32.mrf.mxu0
      %1377 = vmatprep.mubr.f32.mxu0 0.0
      %1378 = vmatmul.mubr.f32.gmra.mxu0 %v1246
      %v1379 = vpop.f32.mrf.mxu0
      %v1380 = vadd.f32 %v1276, %v1379
      %v1381 = vpop.f32.mrf.mxu0
      %1382 = vmatprep.mubr.f32.mxu0 0.0
      %1383 = vmatmul.mubr.f32.gmra.mxu0 %v1247
      %v1384 = vpop.f32.mrf.mxu0
      %v1385 = vadd.f32 %v1276, %v1384
      %v1386 = vpop.f32.mrf.mxu0
      %1387 = vmatprep.mubr.f32.mxu0 0.0
      %1388 = vmatmul.mubr.f32.gmra.mxu0 %v1248
      %v1389 = vpop.f32.mrf.mxu0
      %v1390 = vadd.f32 %v1276, %v1389
      %v1391 = vpop.f32.mrf.mxu0
      %1392 = vmatprep.mubr.f32.mxu0 0.0
      %1393 = vmatmul.mubr.f32.gmra.mxu0 %v1249
      %v1394 = vpop.f32.mrf.mxu0
      %v1395 = vadd.f32 %v1276, %v1394
      %v1396 = vpop.f32.mrf.mxu0
      %1397 = vmatprep.mubr.f32.mxu0 0.0
      %1398 = vmatmul.mubr.f32.gmra.mxu0 %v1250
      %v1399 = vpop.f32.mrf.mxu0
      %v1400 = vadd.f32 %v1276, %v1399
      %v1401 = vpop.f32.mrf.mxu0
      %1402 = vmatprep.mubr.f32.mxu0 0.0
      %1403 = vmatmul.mubr.f32.gmra.mxu0 %v1251
      %v1404 = vpop.f32.mrf.mxu0
      %v1405 = vadd.f32 %v1276, %v1404
      %v1406 = vpop.f32.mrf.mxu0
      %1407 = vmatprep.mubr.f32.mxu0 0.0
      %1408 = vmatmul.mubr.f32.gmra.mxu0 %v1252
      %v1409 = vpop.f32.mrf.mxu0
      %v1410 = vadd.f32 %v1276, %v1409
      %v1411 = vpop.f32.mrf.mxu0
      %1412 = vmatprep.mubr.f32.mxu0 0.0
      %1413 = vmatmul.mubr.f32.gmra.mxu0 %v1253
      %v1414 = vpop.f32.mrf.mxu0
      %v1415 = vadd.f32 %v1276, %v1414
      %v1416 = vpop.f32.mrf.mxu0
      %1417 = vmatprep.mubr.f32.mxu0 0.0
      %1418 = vmatmul.mubr.f32.gmra.mxu0 %v1254
      %v1419 = vpop.f32.mrf.mxu0
      %v1420 = vadd.f32 %v1276, %v1419
      %v1421 = vpop.f32.mrf.mxu0
      %1422 = vdwg.mxu0
      %1423 = vst [vmem:[%s390] sm:$0xff] %v1345
      %1424 = vst [vmem:[%s390 + $0x8] sm:$0xff] %v1350
      %1425 = vst [vmem:[%s390 + $0x10] sm:$0xff] %v1355
      %1426 = vst [vmem:[%s390 + $0x18] sm:$0xff] %v1360
      %1427 = vst [vmem:[%s390 + $0x20] sm:$0xff] %v1365
      %1428 = vst [vmem:[%s390 + $0x28] sm:$0xff] %v1370
      %1429 = vst [vmem:[%s390 + $0x30] sm:$0xff] %v1375
      %1430 = vst [vmem:[%s390 + $0x38] sm:$0xff] %v1380
      %1431 = vst [vmem:[%s390 + $0x40] sm:$0xff] %v1385
      %1432 = vst [vmem:[%s390 + $0x48] sm:$0xff] %v1390
      %1433 = vst [vmem:[%s390 + $0x50] sm:$0xff] %v1395
      %1434 = vst [vmem:[%s390 + $0x58] sm:$0xff] %v1400
      %1435 = vst [vmem:[%s390 + $0x60] sm:$0xff] %v1405
      %1436 = vst [vmem:[%s390 + $0x68] sm:$0xff] %v1410
      %1437 = vst [vmem:[%s390 + $0x70] sm:$0xff] %v1415
      %1438 = vst [vmem:[%s390 + $0x78] sm:$0xff] %v1420
      %s1439 = smul.u32 16, %s24
      %p1440 = scmp.lt.s32.totalorder %s1439, 31
      %s1441 = scalar_select %p1440, %s1439, 31
      %s1442 = smul.addr %s1441, 8
      %s1443 = scalar_lea.vmem %s12, %s1442
      // Predicated region
      $region65: #{mlp3_dropout_layernorm.1} parent=63 // pred_check
        %p1444 = pneg %p278
      $region66: #{mlp3_dropout_layernorm.1} parent=63 // pred_check_branch
        %1446 = sbr.rel (%p1444) target = $region68
      $region67: #{mlp3_dropout_layernorm.1} parent=63 // pred_region
        %s1447 = smul.u32 16, %s24
      $region68: #{mlp3_dropout_layernorm.1} parent=63 // pred_fallthru
        _
    $region64: #{mlp3_dropout_layernorm.1} parent=5 // pred_fallthru
      _
    %p1448 = scmp.le.s32.totalorder 2, %s19
    // Predicated region
    $region69: #{mlp3_dropout_layernorm.1} parent=5 // pred_check
      %p1449 = pneg %p1448
    $region70: #{mlp3_dropout_layernorm.1} parent=5 // pred_check_branch
      %1451 = sbr.rel (%p1449) target = $region72
    $region71: #{mlp3_dropout_layernorm.1} parent=5 // pred_region
      %s1452 = ssub.s32 %s19, 2
      // Predicated region
      $region73: #{mlp3_dropout_layernorm.1} parent=71 // pred_check
        %p1453 = pneg %p284
      $region74: #{mlp3_dropout_layernorm.1} parent=71 // pred_check_branch
        %1455 = sbr.rel (%p1453) target = $region76
      $region75: #{mlp3_dropout_layernorm.1} parent=71 // pred_region
        %s1456 = smul.u32 16, %s25
        %p1457 = scmp.lt.s32.totalorder %s1456, 31
        %s1458 = scalar_select %p1457, %s1456, 31
        %s1459 = smul.addr %s1458, 8
        %s1460 = scalar_lea.vmem %s12, %s1459
      $region76: #{mlp3_dropout_layernorm.1} parent=71 // pred_fallthru
        _
    $region72: #{mlp3_dropout_layernorm.1} parent=5 // pred_fallthru
      _
  $region6: #{mlp3_dropout_layernorm.1} parent=0 // loop_footer
    %s23 = sadd.s32 1, %s19
  $region7: #{mlp3_dropout_layernorm.1} parent=0 // loop_footer_branch
    %18 = sbr.rel target = $region3
  $region8: #{mlp3_dropout_layernorm.1} parent=0 // loop_exit
    _

</llo_original>
